<compile_context>
chip_gen: v5e
topology: v5e:2x2
jax: 0.10.0
libtpu: 0.0.40
codegen_flags: <defaults>
</compile_context>

<pallas_src>
import jax
import jax.numpy as jnp
from jax import lax
from jax.experimental import pallas as pl
from jax.experimental.pallas import tpu as pltpu

VOCAB_SIZE = 5000
NUM_CLASSES = 2


def _round_up(x, m):
    return ((x + m - 1) // m) * m


def _max_tile_and_vmem_limit():
    """Per-generation tile cap + scoped-VMEM limit.

    v5e/v6e (128 MiB physical VMEM): a 1024-row f32 bow tile (double-buffered
    ~42 MiB + in-kernel bf16 temp ~10 MiB) is comfortable and amortizes the
    ~0.35 us per-grid-step overhead.  v7x only has 64 MiB -> cap at 512 rows.
    The fallback (512 / 48 MiB) is safe on every generation.
    """
    try:
        vmem_phys = int(pltpu.get_tpu_info().vmem_capacity_bytes)
    except Exception:
        vmem_phys = 64 * 1024 * 1024
    if vmem_phys >= 100 * 1024 * 1024:
        return 1024, 80 * 1024 * 1024
    return 512, 48 * 1024 * 1024


def _choose_batch_tile(batch, max_tile):
    """Large tiles for HBM-streaming efficiency, but >=2 grid steps once the
    batch is big enough (B > 256) so both v7x TensorCores get work."""
    if batch <= 256:
        return batch                                  # single block == full batch dim
    if batch <= 2 * max_tile:
        return min(_round_up(pl.cdiv(batch, 2), 8), max_tile)   # ~2 equal tiles
    return max_tile


def _linear_kernel(x_ref, w_ref, b_ref, o_ref):
    # x_ref: (tile, VOCAB_SIZE)            f32 bag-of-words counts (exact in bf16)
    # w_ref: (VOCAB_SIZE, 2*NUM_CLASSES)   bf16, columns = [W_hi^T | W_lo^T]
    # b_ref: (1, NUM_CLASSES)              f32
    # o_ref: (tile, NUM_CLASSES)           f32
    x_bf16 = x_ref[...].astype(jnp.bfloat16)
    # Single bf16 MXU pass (N is padded to 128/256 on-chip whether it is 2 or
    # 4, so packing the hi+lo columns is free); accumulate in f32.
    acc = jnp.dot(x_bf16, w_ref[...], preferred_element_type=jnp.float32)
    hi = acc[:, :NUM_CLASSES]
    lo = acc[:, NUM_CLASSES:]
    o_ref[...] = hi + lo + b_ref[...]


def prepare_params(weight, bias):
    """One-time (per parameter update) packing of the nn.Linear parameters.

    weight: (NUM_CLASSES, VOCAB_SIZE) f32   (native PyTorch layout)
    bias:   (NUM_CLASSES,) f32
    Returns w_packed (VOCAB_SIZE, 2*NUM_CLASSES) bf16 with columns
    [W_hi^T | W_lo^T] (bf16 hi/lo split ~= 16 mantissa bits) and a (1, C) f32
    bias row.  Hoisted out of the per-call path per perf review.
    """
    w32 = weight.astype(jnp.float32)
    w_hi = w32.astype(jnp.bfloat16)
    w_lo = (w32 - w_hi.astype(jnp.float32)).astype(jnp.bfloat16)
    w_packed = jnp.concatenate([w_hi.T, w_lo.T], axis=1)       # (VOCAB, 2C) bf16
    bias2d = bias.astype(jnp.float32).reshape(1, NUM_CLASSES)
    return w_packed, bias2d


def bowlr_forward(bow, w_packed, bias2d):
    """Forward of BoWLRClassifier: logits = bow @ W.T + b.

    bow:      (B, VOCAB_SIZE) float32
    w_packed: (VOCAB_SIZE, 2*NUM_CLASSES) bfloat16 from prepare_params
    bias2d:   (1, NUM_CLASSES) float32
    returns   (B, NUM_CLASSES) float32 logits
    """
    B = bow.shape[0]
    max_tile, vmem_limit = _max_tile_and_vmem_limit()
    tile = _choose_batch_tile(B, max_tile)
    grid = (pl.cdiv(B, tile),)

    cost = pl.CostEstimate(
        flops=2 * B * VOCAB_SIZE * 2 * NUM_CLASSES,
        transcendentals=0,
        bytes_accessed=(B * VOCAB_SIZE * 4
                        + VOCAB_SIZE * 2 * NUM_CLASSES * 2
                        + B * NUM_CLASSES * 4),
    )

    return pl.pallas_call(
        _linear_kernel,
        out_shape=jax.ShapeDtypeStruct((B, NUM_CLASSES), jnp.float32),
        grid_spec=pltpu.PrefetchScalarGridSpec(
            num_scalar_prefetch=0,
            grid=grid,
            in_specs=[
                # Bag-of-words batch tile: the only real HBM traffic.  Last dim
                # equals the full array dim (5000), so no host-side padding is
                # materialized; the partial final batch block is masked.
                pl.BlockSpec((tile, VOCAB_SIZE), lambda i: (i, 0)),
                # Packed weight, (K, N) MXU-natural layout, same block every step.
                pl.BlockSpec((VOCAB_SIZE, 2 * NUM_CLASSES), lambda i: (0, 0)),
                # Bias row.
                pl.BlockSpec((1, NUM_CLASSES), lambda i: (0, 0)),
            ],
            out_specs=pl.BlockSpec((tile, NUM_CLASSES), lambda i: (i, 0)),
        ),
        compiler_params=pltpu.CompilerParams(
            dimension_semantics=("parallel",),
            vmem_limit_bytes=vmem_limit,
        ),
        cost_estimate=cost,
    )(bow, w_packed, bias2d)


def init_params(key):
    """Deterministic init mimicking nn.Linear(VOCAB_SIZE, 2) default init,
    kept in PyTorch's native (out_features, in_features) layout."""
    kw, kb = jax.random.split(key)
    bound = 1.0 / jnp.sqrt(jnp.float32(VOCAB_SIZE))
    weight = jax.random.uniform(
        kw, (NUM_CLASSES, VOCAB_SIZE), jnp.float32, minval=-bound, maxval=bound
    )
    bias = jax.random.uniform(
        kb, (NUM_CLASSES,), jnp.float32, minval=-bound, maxval=bound
    )
    return weight, bias


if __name__ == "__main__":
    key = jax.random.PRNGKey(0)
    kp, kx1, kx2 = jax.random.split(key, 3)
    weight, bias = init_params(kp)
    w_packed, bias2d = prepare_params(weight, bias)

    def reference(bow):
        # Full-f32 reference (HIGHEST avoids XLA's default bf16-pass matmul).
        return lax.dot_general(
            bow, weight,
            dimension_numbers=(((1,), (1,)), ((), ())),
            precision=lax.Precision.HIGHEST,
        ) + bias[None, :]

    # Small synthetic bag-of-words batch (documents as count vectors):
    # single full-batch block.
    batch = 8
    bow = jax.random.randint(kx1, (batch, VOCAB_SIZE), 0, 3).astype(jnp.float32)
    out = jax.block_until_ready(bowlr_forward(bow, w_packed, bias2d))
    ref = reference(bow)
    assert out.shape == (batch, NUM_CLASSES)
    assert jnp.allclose(out, ref, atol=2e-3, rtol=2e-3), \
        float(jnp.max(jnp.abs(out - ref)))

    # Larger, non-multiple batch: exercises a >=2-step grid and a partial
    # (masked) final batch block with no host-side padding.
    batch2 = 600
    bow2 = jax.random.randint(kx2, (batch2, VOCAB_SIZE), 0, 3).astype(jnp.float32)
    out2 = jax.block_until_ready(bowlr_forward(bow2, w_packed, bias2d))
    ref2 = reference(bow2)
    assert out2.shape == (batch2, NUM_CLASSES)
    assert jnp.allclose(out2, ref2, atol=2e-3, rtol=2e-3), \
        float(jnp.max(jnp.abs(out2 - ref2)))

    print("KERNEL_OK")
</pallas_src>

<mosaic_0001>
module attributes {stable_mosaic.version = 11 : i64} {
  func.func @_linear_kernel(%arg0: i32, %arg1: memref<8x5000xf32, #tpu.memory_space<vmem>>, %arg2: memref<5000x4xbf16, #tpu.memory_space<vmem>>, %arg3: memref<1x2xf32, #tpu.memory_space<vmem>>, %arg4: memref<8x2xf32, #tpu.memory_space<vmem>>) attributes {dimension_semantics = [#tpu.dimension_semantics<parallel>], iteration_bounds = array<i64: 1>, scalar_prefetch = 0 : i64, scratch_operands = 0 : i64, tpu.core_type = #tpu.core_type<tc>, window_params = [{transform_indices = @transform_0, window_bounds = array<i64: 8, 5000>}, {pipeline_mode = #tpu.pipeline_mode<synchronous>, transform_indices = @transform_1, window_bounds = array<i64: 5000, 4>}, {pipeline_mode = #tpu.pipeline_mode<synchronous>, transform_indices = @transform_2, window_bounds = array<i64: 1, 2>}, {transform_indices = @transform_3, window_bounds = array<i64: 8, 2>}]} {
    %c0 = arith.constant 0 : index
    %c0_0 = arith.constant 0 : index
    %0 = vector.load %arg1[%c0, %c0_0] : memref<8x5000xf32, #tpu.memory_space<vmem>>, vector<8x5000xf32>
    %1 = arith.truncf %0 : vector<8x5000xf32> to vector<8x5000xbf16>
    %c0_1 = arith.constant 0 : index
    %c0_2 = arith.constant 0 : index
    %2 = vector.load %arg2[%c0_1, %c0_2] : memref<5000x4xbf16, #tpu.memory_space<vmem>>, vector<5000x4xbf16>
    %cst = arith.constant dense<0.000000e+00> : vector<8x4xf32>
    %3 = tpu.matmul %1, %2, %cst {dimension_numbers = #tpu.dot_dimension_numbers<[1], [0], [0], [1], [0, 0, 1, 1], [], []>} : vector<8x5000xbf16>, vector<5000x4xbf16>, vector<8x4xf32> -> vector<8x4xf32>
    %4 = vector.extract_strided_slice %3 {offsets = [0, 0], sizes = [8, 2], strides = [1, 1]} : vector<8x4xf32> to vector<8x2xf32>
    %5 = vector.extract_strided_slice %3 {offsets = [0, 2], sizes = [8, 2], strides = [1, 1]} : vector<8x4xf32> to vector<8x2xf32>
    %6 = arith.addf %4, %5 : vector<8x2xf32>
    %c0_3 = arith.constant 0 : index
    %c0_4 = arith.constant 0 : index
    %7 = vector.load %arg3[%c0_3, %c0_4] : memref<1x2xf32, #tpu.memory_space<vmem>>, vector<1x2xf32>
    %8 = vector.broadcast %7 : vector<1x2xf32> to vector<8x2xf32>
    %9 = arith.addf %6, %8 : vector<8x2xf32>
    %c0_5 = arith.constant 0 : index
    %c0_6 = arith.constant 0 : index
    %10 = vector.load %arg4[%c0_5, %c0_6] : memref<8x2xf32, #tpu.memory_space<vmem>>, vector<8x2xf32>
    tpu.vector_store %arg4[%c0_5, %c0_6], %9 {strides = array<i32>} : memref<8x2xf32, #tpu.memory_space<vmem>>, vector<8x2xf32>,
    return
  }
  func.func @transform_0(%arg0: i32) -> (i32, i32) {
    %c0_i32 = arith.constant 0 : i32
    %c0_i32_0 = arith.constant 0 : i32
    return %arg0, %c0_i32 : i32, i32
  }
  func.func @transform_1(%arg0: i32) -> (i32, i32) {
    %c0_i32 = arith.constant 0 : i32
    %c0_i32_0 = arith.constant 0 : i32
    %c0_i32_1 = arith.constant 0 : i32
    return %c0_i32, %c0_i32_0 : i32, i32
  }
  func.func @transform_2(%arg0: i32) -> (i32, i32) {
    %c0_i32 = arith.constant 0 : i32
    %c0_i32_0 = arith.constant 0 : i32
    %c0_i32_1 = arith.constant 0 : i32
    return %c0_i32, %c0_i32_0 : i32, i32
  }
  func.func @transform_3(%arg0: i32) -> (i32, i32) {
    %c0_i32 = arith.constant 0 : i32
    %c0_i32_0 = arith.constant 0 : i32
    return %arg0, %c0_i32 : i32, i32
  }
}

</mosaic_0001>

<llo_original>
// kernel: tpu_custom_call.1
$region0: #{tpu_custom_call.1}
  #allocation0 [shape = 'u32[]', space=smem, size = 0x4, offset = 0x4, fixed_abs, tag = 'smem constant byte address 0x4 - core index']
  #allocation1 [shape = 'u32[72,128]{1,0:T(1,128)}', space=vmem, size = 0x9000, scoped, tag = 'internal scratch']
  %s0 = inlined_call_operand.vmem [shape: f32[8,5000], index: 0, kind: input, shape index: {}]
  %s1 = inlined_call_operand.vmem [shape: bf16[5000,4], index: 1, kind: input, shape index: {}]
  %s2 = inlined_call_operand.vmem [shape: f32[1,2], index: 2, kind: input, shape index: {}]
  %s3 = inlined_call_operand.vmem [shape: f32[8,2], index: 3, kind: output, shape index: {}]
  %s4 = sld [smem:[#allocation0]]
  $region22: #{tpu_custom_call.1} parent=0
    _
  %s6 = ssub.s32 1, %s4
  %s7 = scalar_select 0, %s6, %s4
  // Predicated region
  $region2: #{tpu_custom_call.1} parent=0 // pred_check
    _
  $region3: #{tpu_custom_call.1} parent=0 // pred_check_branch
    %9 = sbr.rel (0) target = $region5
  $region4: #{tpu_custom_call.1} parent=0 // pred_region
    _
  $region5: #{tpu_custom_call.1} parent=0 // pred_fallthru
    _
  // Predicated region
  $region6: #{tpu_custom_call.1} parent=0 // pred_check
    _
  $region7: #{tpu_custom_call.1} parent=0 // pred_check_branch
    %11 = sbr.rel (0) target = $region9
  $region8: #{tpu_custom_call.1} parent=0 // pred_region
    _
  $region9: #{tpu_custom_call.1} parent=0 // pred_fallthru
    _
  // Predicated region
  $region10: #{tpu_custom_call.1} parent=0 // pred_check
    _
  $region11: #{tpu_custom_call.1} parent=0 // pred_check_branch
    %13 = sbr.rel (0) target = $region13
  $region12: #{tpu_custom_call.1} parent=0 // pred_region
    _
  $region13: #{tpu_custom_call.1} parent=0 // pred_fallthru
    _
  %v15 = vld [vmem:[%s0] sm:$0xff]
  %v16 = vld [vmem:[%s0 + $0x8] sm:$0xff]
  %v17 = vld [vmem:[%s0 + $0x10] sm:$0xff]
  %v18 = vld [vmem:[%s0 + $0x18] sm:$0xff]
  %v19 = vld [vmem:[%s0 + $0x20] sm:$0xff]
  %v20 = vld [vmem:[%s0 + $0x28] sm:$0xff]
  %v21 = vld [vmem:[%s0 + $0x30] sm:$0xff]
  %v22 = vld [vmem:[%s0 + $0x38] sm:$0xff]
  %v23 = vld [vmem:[%s0 + $0x40] sm:$0xff]
  %v24 = vld [vmem:[%s0 + $0x48] sm:$0xff]
  %v25 = vld [vmem:[%s0 + $0x50] sm:$0xff]
  %v26 = vld [vmem:[%s0 + $0x58] sm:$0xff]
  %v27 = vld [vmem:[%s0 + $0x60] sm:$0xff]
  %v28 = vld [vmem:[%s0 + $0x68] sm:$0xff]
  %v29 = vld [vmem:[%s0 + $0x70] sm:$0xff]
  %v30 = vld [vmem:[%s0 + $0x78] sm:$0xff]
  %v31 = vld [vmem:[%s0 + $0x80] sm:$0xff]
  %v32 = vld [vmem:[%s0 + $0x88] sm:$0xff]
  %v33 = vld [vmem:[%s0 + $0x90] sm:$0xff]
  %v34 = vld [vmem:[%s0 + $0x98] sm:$0xff]
  %v35 = vld [vmem:[%s0 + $0xa0] sm:$0xff]
  %v36 = vld [vmem:[%s0 + $0xa8] sm:$0xff]
  %v37 = vld [vmem:[%s0 + $0xb0] sm:$0xff]
  %v38 = vld [vmem:[%s0 + $0xb8] sm:$0xff]
  %v39 = vld [vmem:[%s0 + $0xc0] sm:$0xff]
  %v40 = vld [vmem:[%s0 + $0xc8] sm:$0xff]
  %v41 = vld [vmem:[%s0 + $0xd0] sm:$0xff]
  %v42 = vld [vmem:[%s0 + $0xd8] sm:$0xff]
  %v43 = vld [vmem:[%s0 + $0xe0] sm:$0xff]
  %v44 = vld [vmem:[%s0 + $0xe8] sm:$0xff]
  %v45 = vld [vmem:[%s0 + $0xf0] sm:$0xff]
  %v46 = vld [vmem:[%s0 + $0xf8] sm:$0xff]
  %v47 = vld [vmem:[%s0 + $0x100] sm:$0xff]
  %v48 = vld [vmem:[%s0 + $0x108] sm:$0xff]
  %v49 = vld [vmem:[%s0 + $0x110] sm:$0xff]
  %v50 = vld [vmem:[%s0 + $0x118] sm:$0xff]
  %v51 = vld [vmem:[%s0 + $0x120] sm:$0xff]
  %v52 = vld [vmem:[%s0 + $0x128] sm:$0xff]
  %v53 = vld [vmem:[%s0 + $0x130] sm:$0xff]
  %v54 = vld [vmem:[%s0 + $0x138] sm:$0xff]
  %v55 = vpack.c.bf16 %v15, %v15
  %v56 = vpack.c.bf16 %v16, %v16
  %v57 = vpack.c.bf16 %v17, %v17
  %v58 = vpack.c.bf16 %v18, %v18
  %v59 = vpack.c.bf16 %v19, %v19
  %v60 = vpack.c.bf16 %v20, %v20
  %v61 = vpack.c.bf16 %v21, %v21
  %v62 = vpack.c.bf16 %v22, %v22
  %v63 = vpack.c.bf16 %v23, %v23
  %v64 = vpack.c.bf16 %v24, %v24
  %v65 = vpack.c.bf16 %v25, %v25
  %v66 = vpack.c.bf16 %v26, %v26
  %v67 = vpack.c.bf16 %v27, %v27
  %v68 = vpack.c.bf16 %v28, %v28
  %v69 = vpack.c.bf16 %v29, %v29
  %v70 = vpack.c.bf16 %v30, %v30
  %v71 = vpack.c.bf16 %v31, %v31
  %v72 = vpack.c.bf16 %v32, %v32
  %v73 = vpack.c.bf16 %v33, %v33
  %v74 = vpack.c.bf16 %v34, %v34
  %v75 = vpack.c.bf16 %v35, %v35
  %v76 = vpack.c.bf16 %v36, %v36
  %v77 = vpack.c.bf16 %v37, %v37
  %v78 = vpack.c.bf16 %v38, %v38
  %v79 = vpack.c.bf16 %v39, %v39
  %v80 = vpack.c.bf16 %v40, %v40
  %v81 = vpack.c.bf16 %v41, %v41
  %v82 = vpack.c.bf16 %v42, %v42
  %v83 = vpack.c.bf16 %v43, %v43
  %v84 = vpack.c.bf16 %v44, %v44
  %v85 = vpack.c.bf16 %v45, %v45
  %v86 = vpack.c.bf16 %v46, %v46
  %v87 = vpack.c.bf16 %v47, %v47
  %v88 = vpack.c.bf16 %v48, %v48
  %v89 = vpack.c.bf16 %v49, %v49
  %v90 = vpack.c.bf16 %v50, %v50
  %v91 = vpack.c.bf16 %v51, %v51
  %v92 = vpack.c.bf16 %v52, %v52
  %v93 = vpack.c.bf16 %v53, %v53
  %v94 = vpack.c.bf16 %v54, %v54
  %v95 = vld [vmem:[%s1] sm:$0xf]
  %v96 = vld [vmem:[%s1 + $0x4] sm:$0xf]
  %v97 = vld [vmem:[%s1 + $0x8] sm:$0xf]
  %v98 = vld [vmem:[%s1 + $0xc] sm:$0xf]
  %v99 = vld [vmem:[%s1 + $0x10] sm:$0xf]
  %v100 = vld [vmem:[%s1 + $0x14] sm:$0xf]
  %v101 = vld [vmem:[%s1 + $0x18] sm:$0xf]
  %v102 = vld [vmem:[%s1 + $0x1c] sm:$0xf]
  %v103 = vld [vmem:[%s1 + $0x20] sm:$0xf]
  %v104 = vld [vmem:[%s1 + $0x24] sm:$0xf]
  %v105 = vld [vmem:[%s1 + $0x28] sm:$0xf]
  %v106 = vld [vmem:[%s1 + $0x2c] sm:$0xf]
  %v107 = vld [vmem:[%s1 + $0x30] sm:$0xf]
  %v108 = vld [vmem:[%s1 + $0x34] sm:$0xf]
  %v109 = vld [vmem:[%s1 + $0x38] sm:$0xf]
  %v110 = vld [vmem:[%s1 + $0x3c] sm:$0xf]
  %v111 = vld [vmem:[%s1 + $0x40] sm:$0xf]
  %v112 = vld [vmem:[%s1 + $0x44] sm:$0xf]
  %v113 = vld [vmem:[%s1 + $0x48] sm:$0xf]
  %v114 = vld [vmem:[%s1 + $0x4c] sm:$0xf]
  %v115 = vld [vmem:[%s1 + $0x50] sm:$0xf]
  %v116 = vld [vmem:[%s1 + $0x54] sm:$0xf]
  %v117 = vld [vmem:[%s1 + $0x58] sm:$0xf]
  %v118 = vld [vmem:[%s1 + $0x5c] sm:$0xf]
  %v119 = vld [vmem:[%s1 + $0x60] sm:$0xf]
  %v120 = vld [vmem:[%s1 + $0x64] sm:$0xf]
  %v121 = vld [vmem:[%s1 + $0x68] sm:$0xf]
  %v122 = vld [vmem:[%s1 + $0x6c] sm:$0xf]
  %v123 = vld [vmem:[%s1 + $0x70] sm:$0xf]
  %v124 = vld [vmem:[%s1 + $0x74] sm:$0xf]
  %v125 = vld [vmem:[%s1 + $0x78] sm:$0xf]
  %v126 = vld [vmem:[%s1 + $0x7c] sm:$0xf]
  %v127 = vld [vmem:[%s1 + $0x80] sm:$0xf]
  %v128 = vld [vmem:[%s1 + $0x84] sm:$0xf]
  %v129 = vld [vmem:[%s1 + $0x88] sm:$0xf]
  %v130 = vld [vmem:[%s1 + $0x8c] sm:$0xf]
  %v131 = vld [vmem:[%s1 + $0x90] sm:$0xf]
  %v132 = vld [vmem:[%s1 + $0x94] sm:$0xf]
  %v133 = vld [vmem:[%s1 + $0x98] sm:$0xf]
  %v134 = vld [vmem:[%s1 + $0x9c] sm:$0xf]
  %v135 = vld [vmem:[%s1 + $0xa0] sm:$0xf]
  %v136 = vld [vmem:[%s1 + $0xa4] sm:$0xf]
  %v137 = vld [vmem:[%s1 + $0xa8] sm:$0xf]
  %v138 = vld [vmem:[%s1 + $0xac] sm:$0xf]
  %v139 = vld [vmem:[%s1 + $0xb0] sm:$0xf]
  %v140 = vld [vmem:[%s1 + $0xb4] sm:$0xf]
  %v141 = vld [vmem:[%s1 + $0xb8] sm:$0xf]
  %v142 = vld [vmem:[%s1 + $0xbc] sm:$0xf]
  %v143 = vld [vmem:[%s1 + $0xc0] sm:$0xf]
  %v144 = vld [vmem:[%s1 + $0xc4] sm:$0xf]
  %v145 = vld [vmem:[%s1 + $0xc8] sm:$0xf]
  %v146 = vld [vmem:[%s1 + $0xcc] sm:$0xf]
  %v147 = vld [vmem:[%s1 + $0xd0] sm:$0xf]
  %v148 = vld [vmem:[%s1 + $0xd4] sm:$0xf]
  %v149 = vld [vmem:[%s1 + $0xd8] sm:$0xf]
  %v150 = vld [vmem:[%s1 + $0xdc] sm:$0xf]
  %v151 = vld [vmem:[%s1 + $0xe0] sm:$0xf]
  %v152 = vld [vmem:[%s1 + $0xe4] sm:$0xf]
  %v153 = vld [vmem:[%s1 + $0xe8] sm:$0xf]
  %v154 = vld [vmem:[%s1 + $0xec] sm:$0xf]
  %v155 = vld [vmem:[%s1 + $0xf0] sm:$0xf]
  %v156 = vld [vmem:[%s1 + $0xf4] sm:$0xf]
  %v157 = vld [vmem:[%s1 + $0xf8] sm:$0xf]
  %v158 = vld [vmem:[%s1 + $0xfc] sm:$0xf]
  %v159 = vld [vmem:[%s1 + $0x100] sm:$0xf]
  %v160 = vld [vmem:[%s1 + $0x104] sm:$0xf]
  %v161 = vld [vmem:[%s1 + $0x108] sm:$0xf]
  %v162 = vld [vmem:[%s1 + $0x10c] sm:$0xf]
  %v163 = vld [vmem:[%s1 + $0x110] sm:$0xf]
  %v164 = vld [vmem:[%s1 + $0x114] sm:$0xf]
  %v165 = vld [vmem:[%s1 + $0x118] sm:$0xf]
  %v166 = vld [vmem:[%s1 + $0x11c] sm:$0xf]
  %v167 = vld [vmem:[%s1 + $0x120] sm:$0xf]
  %v168 = vld [vmem:[%s1 + $0x124] sm:$0xf]
  %v169 = vld [vmem:[%s1 + $0x128] sm:$0xf]
  %v170 = vld [vmem:[%s1 + $0x12c] sm:$0xf]
  %v171 = vld [vmem:[%s1 + $0x130] sm:$0xf]
  %v172 = vld [vmem:[%s1 + $0x134] sm:$0xf]
  %v173 = vld [vmem:[%s1 + $0x138] sm:$0xf]
  %v174 = vld [vmem:[%s1 + $0x13c] sm:$0xf]
  %v175 = vld [vmem:[%s1 + $0x140] sm:$0xf]
  %v176 = vld [vmem:[%s1 + $0x144] sm:$0xf]
  %v177 = vld [vmem:[%s1 + $0x148] sm:$0xf]
  %v178 = vld [vmem:[%s1 + $0x14c] sm:$0xf]
  %v179 = vld [vmem:[%s1 + $0x150] sm:$0xf]
  %v180 = vld [vmem:[%s1 + $0x154] sm:$0xf]
  %v181 = vld [vmem:[%s1 + $0x158] sm:$0xf]
  %v182 = vld [vmem:[%s1 + $0x15c] sm:$0xf]
  %v183 = vld [vmem:[%s1 + $0x160] sm:$0xf]
  %v184 = vld [vmem:[%s1 + $0x164] sm:$0xf]
  %v185 = vld [vmem:[%s1 + $0x168] sm:$0xf]
  %v186 = vld [vmem:[%s1 + $0x16c] sm:$0xf]
  %v187 = vld [vmem:[%s1 + $0x170] sm:$0xf]
  %v188 = vld [vmem:[%s1 + $0x174] sm:$0xf]
  %v189 = vld [vmem:[%s1 + $0x178] sm:$0xf]
  %v190 = vld [vmem:[%s1 + $0x17c] sm:$0xf]
  %v191 = vld [vmem:[%s1 + $0x180] sm:$0xf]
  %v192 = vld [vmem:[%s1 + $0x184] sm:$0xf]
  %v193 = vld [vmem:[%s1 + $0x188] sm:$0xf]
  %v194 = vld [vmem:[%s1 + $0x18c] sm:$0xf]
  %v195 = vld [vmem:[%s1 + $0x190] sm:$0xf]
  %v196 = vld [vmem:[%s1 + $0x194] sm:$0xf]
  %v197 = vld [vmem:[%s1 + $0x198] sm:$0xf]
  %v198 = vld [vmem:[%s1 + $0x19c] sm:$0xf]
  %v199 = vld [vmem:[%s1 + $0x1a0] sm:$0xf]
  %v200 = vld [vmem:[%s1 + $0x1a4] sm:$0xf]
  %v201 = vld [vmem:[%s1 + $0x1a8] sm:$0xf]
  %v202 = vld [vmem:[%s1 + $0x1ac] sm:$0xf]
  %v203 = vld [vmem:[%s1 + $0x1b0] sm:$0xf]
  %v204 = vld [vmem:[%s1 + $0x1b4] sm:$0xf]
  %v205 = vld [vmem:[%s1 + $0x1b8] sm:$0xf]
  %v206 = vld [vmem:[%s1 + $0x1bc] sm:$0xf]
  %v207 = vld [vmem:[%s1 + $0x1c0] sm:$0xf]
  %v208 = vld [vmem:[%s1 + $0x1c4] sm:$0xf]
  %v209 = vld [vmem:[%s1 + $0x1c8] sm:$0xf]
  %v210 = vld [vmem:[%s1 + $0x1cc] sm:$0xf]
  %v211 = vld [vmem:[%s1 + $0x1d0] sm:$0xf]
  %v212 = vld [vmem:[%s1 + $0x1d4] sm:$0xf]
  %v213 = vld [vmem:[%s1 + $0x1d8] sm:$0xf]
  %v214 = vld [vmem:[%s1 + $0x1dc] sm:$0xf]
  %v215 = vld [vmem:[%s1 + $0x1e0] sm:$0xf]
  %v216 = vld [vmem:[%s1 + $0x1e4] sm:$0xf]
  %v217 = vld [vmem:[%s1 + $0x1e8] sm:$0xf]
  %v218 = vld [vmem:[%s1 + $0x1ec] sm:$0xf]
  %v219 = vld [vmem:[%s1 + $0x1f0] sm:$0xf]
  %v220 = vld [vmem:[%s1 + $0x1f4] sm:$0xf]
  %v221 = vld [vmem:[%s1 + $0x1f8] sm:$0xf]
  %v222 = vld [vmem:[%s1 + $0x1fc] sm:$0xf]
  %v223 = vld [vmem:[%s1 + $0x200] sm:$0xf]
  %v224 = vld [vmem:[%s1 + $0x204] sm:$0xf]
  %v225 = vld [vmem:[%s1 + $0x208] sm:$0xf]
  %v226 = vld [vmem:[%s1 + $0x20c] sm:$0xf]
  %v227 = vld [vmem:[%s1 + $0x210] sm:$0xf]
  %v228 = vld [vmem:[%s1 + $0x214] sm:$0xf]
  %v229 = vld [vmem:[%s1 + $0x218] sm:$0xf]
  %v230 = vld [vmem:[%s1 + $0x21c] sm:$0xf]
  %v231 = vld [vmem:[%s1 + $0x220] sm:$0xf]
  %v232 = vld [vmem:[%s1 + $0x224] sm:$0xf]
  %v233 = vld [vmem:[%s1 + $0x228] sm:$0xf]
  %v234 = vld [vmem:[%s1 + $0x22c] sm:$0xf]
  %v235 = vld [vmem:[%s1 + $0x230] sm:$0xf]
  %v236 = vld [vmem:[%s1 + $0x234] sm:$0xf]
  %v237 = vld [vmem:[%s1 + $0x238] sm:$0xf]
  %v238 = vld [vmem:[%s1 + $0x23c] sm:$0xf]
  %v239 = vld [vmem:[%s1 + $0x240] sm:$0xf]
  %v240 = vld [vmem:[%s1 + $0x244] sm:$0xf]
  %v241 = vld [vmem:[%s1 + $0x248] sm:$0xf]
  %v242 = vld [vmem:[%s1 + $0x24c] sm:$0xf]
  %v243 = vld [vmem:[%s1 + $0x250] sm:$0xf]
  %v244 = vld [vmem:[%s1 + $0x254] sm:$0xf]
  %v245 = vld [vmem:[%s1 + $0x258] sm:$0xf]
  %v246 = vld [vmem:[%s1 + $0x25c] sm:$0xf]
  %v247 = vld [vmem:[%s1 + $0x260] sm:$0xf]
  %v248 = vld [vmem:[%s1 + $0x264] sm:$0xf]
  %v249 = vld [vmem:[%s1 + $0x268] sm:$0xf]
  %v250 = vld [vmem:[%s1 + $0x26c] sm:$0xf]
  %v251 = vld [vmem:[%s1 + $0x270] sm:$0xf]
  %v252 = vld [vmem:[%s1 + $0x274] sm:$0xf]
  %v253 = vld [vmem:[%s1 + $0x278] sm:$0xf]
  %v254 = vld [vmem:[%s1 + $0x27c] sm:$0xf]
  %v255 = vld [vmem:[%s1 + $0x280] sm:$0xf]
  %v256 = vld [vmem:[%s1 + $0x284] sm:$0xf]
  %v257 = vld [vmem:[%s1 + $0x288] sm:$0xf]
  %v258 = vld [vmem:[%s1 + $0x28c] sm:$0xf]
  %v259 = vld [vmem:[%s1 + $0x290] sm:$0xf]
  %v260 = vld [vmem:[%s1 + $0x294] sm:$0xf]
  %v261 = vld [vmem:[%s1 + $0x298] sm:$0xf]
  %v262 = vld [vmem:[%s1 + $0x29c] sm:$0xf]
  %v263 = vld [vmem:[%s1 + $0x2a0] sm:$0xf]
  %v264 = vld [vmem:[%s1 + $0x2a4] sm:$0xf]
  %v265 = vld [vmem:[%s1 + $0x2a8] sm:$0xf]
  %v266 = vld [vmem:[%s1 + $0x2ac] sm:$0xf]
  %v267 = vld [vmem:[%s1 + $0x2b0] sm:$0xf]
  %v268 = vld [vmem:[%s1 + $0x2b4] sm:$0xf]
  %v269 = vld [vmem:[%s1 + $0x2b8] sm:$0xf]
  %v270 = vld [vmem:[%s1 + $0x2bc] sm:$0xf]
  %v271 = vld [vmem:[%s1 + $0x2c0] sm:$0xf]
  %v272 = vld [vmem:[%s1 + $0x2c4] sm:$0xf]
  %v273 = vld [vmem:[%s1 + $0x2c8] sm:$0xf]
  %v274 = vld [vmem:[%s1 + $0x2cc] sm:$0xf]
  %v275 = vld [vmem:[%s1 + $0x2d0] sm:$0xf]
  %v276 = vld [vmem:[%s1 + $0x2d4] sm:$0xf]
  %v277 = vld [vmem:[%s1 + $0x2d8] sm:$0xf]
  %v278 = vld [vmem:[%s1 + $0x2dc] sm:$0xf]
  %v279 = vld [vmem:[%s1 + $0x2e0] sm:$0xf]
  %v280 = vld [vmem:[%s1 + $0x2e4] sm:$0xf]
  %v281 = vld [vmem:[%s1 + $0x2e8] sm:$0xf]
  %v282 = vld [vmem:[%s1 + $0x2ec] sm:$0xf]
  %v283 = vld [vmem:[%s1 + $0x2f0] sm:$0xf]
  %v284 = vld [vmem:[%s1 + $0x2f4] sm:$0xf]
  %v285 = vld [vmem:[%s1 + $0x2f8] sm:$0xf]
  %v286 = vld [vmem:[%s1 + $0x2fc] sm:$0xf]
  %v287 = vld [vmem:[%s1 + $0x300] sm:$0xf]
  %v288 = vld [vmem:[%s1 + $0x304] sm:$0xf]
  %v289 = vld [vmem:[%s1 + $0x308] sm:$0xf]
  %v290 = vld [vmem:[%s1 + $0x30c] sm:$0xf]
  %v291 = vld [vmem:[%s1 + $0x310] sm:$0xf]
  %v292 = vld [vmem:[%s1 + $0x314] sm:$0xf]
  %v293 = vld [vmem:[%s1 + $0x318] sm:$0xf]
  %v294 = vld [vmem:[%s1 + $0x31c] sm:$0xf]
  %v295 = vld [vmem:[%s1 + $0x320] sm:$0xf]
  %v296 = vld [vmem:[%s1 + $0x324] sm:$0xf]
  %v297 = vld [vmem:[%s1 + $0x328] sm:$0xf]
  %v298 = vld [vmem:[%s1 + $0x32c] sm:$0xf]
  %v299 = vld [vmem:[%s1 + $0x330] sm:$0xf]
  %v300 = vld [vmem:[%s1 + $0x334] sm:$0xf]
  %v301 = vld [vmem:[%s1 + $0x338] sm:$0xf]
  %v302 = vld [vmem:[%s1 + $0x33c] sm:$0xf]
  %v303 = vld [vmem:[%s1 + $0x340] sm:$0xf]
  %v304 = vld [vmem:[%s1 + $0x344] sm:$0xf]
  %v305 = vld [vmem:[%s1 + $0x348] sm:$0xf]
  %v306 = vld [vmem:[%s1 + $0x34c] sm:$0xf]
  %v307 = vld [vmem:[%s1 + $0x350] sm:$0xf]
  %v308 = vld [vmem:[%s1 + $0x354] sm:$0xf]
  %v309 = vld [vmem:[%s1 + $0x358] sm:$0xf]
  %v310 = vld [vmem:[%s1 + $0x35c] sm:$0xf]
  %v311 = vld [vmem:[%s1 + $0x360] sm:$0xf]
  %v312 = vld [vmem:[%s1 + $0x364] sm:$0xf]
  %v313 = vld [vmem:[%s1 + $0x368] sm:$0xf]
  %v314 = vld [vmem:[%s1 + $0x36c] sm:$0xf]
  %v315 = vld [vmem:[%s1 + $0x370] sm:$0xf]
  %v316 = vld [vmem:[%s1 + $0x374] sm:$0xf]
  %v317 = vld [vmem:[%s1 + $0x378] sm:$0xf]
  %v318 = vld [vmem:[%s1 + $0x37c] sm:$0xf]
  %v319 = vld [vmem:[%s1 + $0x380] sm:$0xf]
  %v320 = vld [vmem:[%s1 + $0x384] sm:$0xf]
  %v321 = vld [vmem:[%s1 + $0x388] sm:$0xf]
  %v322 = vld [vmem:[%s1 + $0x38c] sm:$0xf]
  %v323 = vld [vmem:[%s1 + $0x390] sm:$0xf]
  %v324 = vld [vmem:[%s1 + $0x394] sm:$0xf]
  %v325 = vld [vmem:[%s1 + $0x398] sm:$0xf]
  %v326 = vld [vmem:[%s1 + $0x39c] sm:$0xf]
  %v327 = vld [vmem:[%s1 + $0x3a0] sm:$0xf]
  %v328 = vld [vmem:[%s1 + $0x3a4] sm:$0xf]
  %v329 = vld [vmem:[%s1 + $0x3a8] sm:$0xf]
  %v330 = vld [vmem:[%s1 + $0x3ac] sm:$0xf]
  %v331 = vld [vmem:[%s1 + $0x3b0] sm:$0xf]
  %v332 = vld [vmem:[%s1 + $0x3b4] sm:$0xf]
  %v333 = vld [vmem:[%s1 + $0x3b8] sm:$0xf]
  %v334 = vld [vmem:[%s1 + $0x3bc] sm:$0xf]
  %v335 = vld [vmem:[%s1 + $0x3c0] sm:$0xf]
  %v336 = vld [vmem:[%s1 + $0x3c4] sm:$0xf]
  %v337 = vld [vmem:[%s1 + $0x3c8] sm:$0xf]
  %v338 = vld [vmem:[%s1 + $0x3cc] sm:$0xf]
  %v339 = vld [vmem:[%s1 + $0x3d0] sm:$0xf]
  %v340 = vld [vmem:[%s1 + $0x3d4] sm:$0xf]
  %v341 = vld [vmem:[%s1 + $0x3d8] sm:$0xf]
  %v342 = vld [vmem:[%s1 + $0x3dc] sm:$0xf]
  %v343 = vld [vmem:[%s1 + $0x3e0] sm:$0xf]
  %v344 = vld [vmem:[%s1 + $0x3e4] sm:$0xf]
  %v345 = vld [vmem:[%s1 + $0x3e8] sm:$0xf]
  %v346 = vld [vmem:[%s1 + $0x3ec] sm:$0xf]
  %v347 = vld [vmem:[%s1 + $0x3f0] sm:$0xf]
  %v348 = vld [vmem:[%s1 + $0x3f4] sm:$0xf]
  %v349 = vld [vmem:[%s1 + $0x3f8] sm:$0xf]
  %v350 = vld [vmem:[%s1 + $0x3fc] sm:$0xf]
  %v351 = vld [vmem:[%s1 + $0x400] sm:$0xf]
  %v352 = vld [vmem:[%s1 + $0x404] sm:$0xf]
  %v353 = vld [vmem:[%s1 + $0x408] sm:$0xf]
  %v354 = vld [vmem:[%s1 + $0x40c] sm:$0xf]
  %v355 = vld [vmem:[%s1 + $0x410] sm:$0xf]
  %v356 = vld [vmem:[%s1 + $0x414] sm:$0xf]
  %v357 = vld [vmem:[%s1 + $0x418] sm:$0xf]
  %v358 = vld [vmem:[%s1 + $0x41c] sm:$0xf]
  %v359 = vld [vmem:[%s1 + $0x420] sm:$0xf]
  %v360 = vld [vmem:[%s1 + $0x424] sm:$0xf]
  %v361 = vld [vmem:[%s1 + $0x428] sm:$0xf]
  %v362 = vld [vmem:[%s1 + $0x42c] sm:$0xf]
  %v363 = vld [vmem:[%s1 + $0x430] sm:$0xf]
  %v364 = vld [vmem:[%s1 + $0x434] sm:$0xf]
  %v365 = vld [vmem:[%s1 + $0x438] sm:$0xf]
  %v366 = vld [vmem:[%s1 + $0x43c] sm:$0xf]
  %v367 = vld [vmem:[%s1 + $0x440] sm:$0xf]
  %v368 = vld [vmem:[%s1 + $0x444] sm:$0xf]
  %v369 = vld [vmem:[%s1 + $0x448] sm:$0xf]
  %v370 = vld [vmem:[%s1 + $0x44c] sm:$0xf]
  %v371 = vld [vmem:[%s1 + $0x450] sm:$0xf]
  %v372 = vld [vmem:[%s1 + $0x454] sm:$0xf]
  %v373 = vld [vmem:[%s1 + $0x458] sm:$0xf]
  %v374 = vld [vmem:[%s1 + $0x45c] sm:$0xf]
  %v375 = vld [vmem:[%s1 + $0x460] sm:$0xf]
  %v376 = vld [vmem:[%s1 + $0x464] sm:$0xf]
  %v377 = vld [vmem:[%s1 + $0x468] sm:$0xf]
  %v378 = vld [vmem:[%s1 + $0x46c] sm:$0xf]
  %v379 = vld [vmem:[%s1 + $0x470] sm:$0xf]
  %v380 = vld [vmem:[%s1 + $0x474] sm:$0xf]
  %v381 = vld [vmem:[%s1 + $0x478] sm:$0xf]
  %v382 = vld [vmem:[%s1 + $0x47c] sm:$0xf]
  %v383 = vld [vmem:[%s1 + $0x480] sm:$0xf]
  %v384 = vld [vmem:[%s1 + $0x484] sm:$0xf]
  %v385 = vld [vmem:[%s1 + $0x488] sm:$0xf]
  %v386 = vld [vmem:[%s1 + $0x48c] sm:$0xf]
  %v387 = vld [vmem:[%s1 + $0x490] sm:$0xf]
  %v388 = vld [vmem:[%s1 + $0x494] sm:$0xf]
  %v389 = vld [vmem:[%s1 + $0x498] sm:$0xf]
  %v390 = vld [vmem:[%s1 + $0x49c] sm:$0xf]
  %v391 = vld [vmem:[%s1 + $0x4a0] sm:$0xf]
  %v392 = vld [vmem:[%s1 + $0x4a4] sm:$0xf]
  %v393 = vld [vmem:[%s1 + $0x4a8] sm:$0xf]
  %v394 = vld [vmem:[%s1 + $0x4ac] sm:$0xf]
  %v395 = vld [vmem:[%s1 + $0x4b0] sm:$0xf]
  %v396 = vld [vmem:[%s1 + $0x4b4] sm:$0xf]
  %v397 = vld [vmem:[%s1 + $0x4b8] sm:$0xf]
  %v398 = vld [vmem:[%s1 + $0x4bc] sm:$0xf]
  %v399 = vld [vmem:[%s1 + $0x4c0] sm:$0xf]
  %v400 = vld [vmem:[%s1 + $0x4c4] sm:$0xf]
  %v401 = vld [vmem:[%s1 + $0x4c8] sm:$0xf]
  %v402 = vld [vmem:[%s1 + $0x4cc] sm:$0xf]
  %v403 = vld [vmem:[%s1 + $0x4d0] sm:$0xf]
  %v404 = vld [vmem:[%s1 + $0x4d4] sm:$0xf]
  %v405 = vld [vmem:[%s1 + $0x4d8] sm:$0xf]
  %v406 = vld [vmem:[%s1 + $0x4dc] sm:$0xf]
  %v407 = vld [vmem:[%s1 + $0x4e0] sm:$0xf]
  %v408 = vld [vmem:[%s1 + $0x4e4] sm:$0xf]
  %v409 = vld [vmem:[%s1 + $0x4e8] sm:$0xf]
  %v410 = vld [vmem:[%s1 + $0x4ec] sm:$0xf]
  %v411 = vld [vmem:[%s1 + $0x4f0] sm:$0xf]
  %v412 = vld [vmem:[%s1 + $0x4f4] sm:$0xf]
  %v413 = vld [vmem:[%s1 + $0x4f8] sm:$0xf]
  %v414 = vld [vmem:[%s1 + $0x4fc] sm:$0xf]
  %v415 = vld [vmem:[%s1 + $0x500] sm:$0xf]
  %v416 = vld [vmem:[%s1 + $0x504] sm:$0xf]
  %v417 = vld [vmem:[%s1 + $0x508] sm:$0xf]
  %v418 = vld [vmem:[%s1 + $0x50c] sm:$0xf]
  %v419 = vld [vmem:[%s1 + $0x510] sm:$0xf]
  %v420 = vld [vmem:[%s1 + $0x514] sm:$0xf]
  %v421 = vld [vmem:[%s1 + $0x518] sm:$0xf]
  %v422 = vld [vmem:[%s1 + $0x51c] sm:$0xf]
  %v423 = vld [vmem:[%s1 + $0x520] sm:$0xf]
  %v424 = vld [vmem:[%s1 + $0x524] sm:$0xf]
  %v425 = vld [vmem:[%s1 + $0x528] sm:$0xf]
  %v426 = vld [vmem:[%s1 + $0x52c] sm:$0xf]
  %v427 = vld [vmem:[%s1 + $0x530] sm:$0xf]
  %v428 = vld [vmem:[%s1 + $0x534] sm:$0xf]
  %v429 = vld [vmem:[%s1 + $0x538] sm:$0xf]
  %v430 = vld [vmem:[%s1 + $0x53c] sm:$0xf]
  %v431 = vld [vmem:[%s1 + $0x540] sm:$0xf]
  %v432 = vld [vmem:[%s1 + $0x544] sm:$0xf]
  %v433 = vld [vmem:[%s1 + $0x548] sm:$0xf]
  %v434 = vld [vmem:[%s1 + $0x54c] sm:$0xf]
  %v435 = vld [vmem:[%s1 + $0x550] sm:$0xf]
  %v436 = vld [vmem:[%s1 + $0x554] sm:$0xf]
  %v437 = vld [vmem:[%s1 + $0x558] sm:$0xf]
  %v438 = vld [vmem:[%s1 + $0x55c] sm:$0xf]
  %v439 = vld [vmem:[%s1 + $0x560] sm:$0xf]
  %v440 = vld [vmem:[%s1 + $0x564] sm:$0xf]
  %v441 = vld [vmem:[%s1 + $0x568] sm:$0xf]
  %v442 = vld [vmem:[%s1 + $0x56c] sm:$0xf]
  %v443 = vld [vmem:[%s1 + $0x570] sm:$0xf]
  %v444 = vld [vmem:[%s1 + $0x574] sm:$0xf]
  %v445 = vld [vmem:[%s1 + $0x578] sm:$0xf]
  %v446 = vld [vmem:[%s1 + $0x57c] sm:$0xf]
  %v447 = vld [vmem:[%s1 + $0x580] sm:$0xf]
  %v448 = vld [vmem:[%s1 + $0x584] sm:$0xf]
  %v449 = vld [vmem:[%s1 + $0x588] sm:$0xf]
  %v450 = vld [vmem:[%s1 + $0x58c] sm:$0xf]
  %v451 = vld [vmem:[%s1 + $0x590] sm:$0xf]
  %v452 = vld [vmem:[%s1 + $0x594] sm:$0xf]
  %v453 = vld [vmem:[%s1 + $0x598] sm:$0xf]
  %v454 = vld [vmem:[%s1 + $0x59c] sm:$0xf]
  %v455 = vld [vmem:[%s1 + $0x5a0] sm:$0xf]
  %v456 = vld [vmem:[%s1 + $0x5a4] sm:$0xf]
  %v457 = vld [vmem:[%s1 + $0x5a8] sm:$0xf]
  %v458 = vld [vmem:[%s1 + $0x5ac] sm:$0xf]
  %v459 = vld [vmem:[%s1 + $0x5b0] sm:$0xf]
  %v460 = vld [vmem:[%s1 + $0x5b4] sm:$0xf]
  %v461 = vld [vmem:[%s1 + $0x5b8] sm:$0xf]
  %v462 = vld [vmem:[%s1 + $0x5bc] sm:$0xf]
  %v463 = vld [vmem:[%s1 + $0x5c0] sm:$0xf]
  %v464 = vld [vmem:[%s1 + $0x5c4] sm:$0xf]
  %v465 = vld [vmem:[%s1 + $0x5c8] sm:$0xf]
  %v466 = vld [vmem:[%s1 + $0x5cc] sm:$0xf]
  %v467 = vld [vmem:[%s1 + $0x5d0] sm:$0xf]
  %v468 = vld [vmem:[%s1 + $0x5d4] sm:$0xf]
  %v469 = vld [vmem:[%s1 + $0x5d8] sm:$0xf]
  %v470 = vld [vmem:[%s1 + $0x5dc] sm:$0xf]
  %v471 = vld [vmem:[%s1 + $0x5e0] sm:$0xf]
  %v472 = vld [vmem:[%s1 + $0x5e4] sm:$0xf]
  %v473 = vld [vmem:[%s1 + $0x5e8] sm:$0xf]
  %v474 = vld [vmem:[%s1 + $0x5ec] sm:$0xf]
  %v475 = vld [vmem:[%s1 + $0x5f0] sm:$0xf]
  %v476 = vld [vmem:[%s1 + $0x5f4] sm:$0xf]
  %v477 = vld [vmem:[%s1 + $0x5f8] sm:$0xf]
  %v478 = vld [vmem:[%s1 + $0x5fc] sm:$0xf]
  %v479 = vld [vmem:[%s1 + $0x600] sm:$0xf]
  %v480 = vld [vmem:[%s1 + $0x604] sm:$0xf]
  %v481 = vld [vmem:[%s1 + $0x608] sm:$0xf]
  %v482 = vld [vmem:[%s1 + $0x60c] sm:$0xf]
  %v483 = vld [vmem:[%s1 + $0x610] sm:$0xf]
  %v484 = vld [vmem:[%s1 + $0x614] sm:$0xf]
  %v485 = vld [vmem:[%s1 + $0x618] sm:$0xf]
  %v486 = vld [vmem:[%s1 + $0x61c] sm:$0xf]
  %v487 = vld [vmem:[%s1 + $0x620] sm:$0xf]
  %v488 = vld [vmem:[%s1 + $0x624] sm:$0xf]
  %v489 = vld [vmem:[%s1 + $0x628] sm:$0xf]
  %v490 = vld [vmem:[%s1 + $0x62c] sm:$0xf]
  %v491 = vld [vmem:[%s1 + $0x630] sm:$0xf]
  %v492 = vld [vmem:[%s1 + $0x634] sm:$0xf]
  %v493 = vld [vmem:[%s1 + $0x638] sm:$0xf]
  %v494 = vld [vmem:[%s1 + $0x63c] sm:$0xf]
  %v495 = vld [vmem:[%s1 + $0x640] sm:$0xf]
  %v496 = vld [vmem:[%s1 + $0x644] sm:$0xf]
  %v497 = vld [vmem:[%s1 + $0x648] sm:$0xf]
  %v498 = vld [vmem:[%s1 + $0x64c] sm:$0xf]
  %v499 = vld [vmem:[%s1 + $0x650] sm:$0xf]
  %v500 = vld [vmem:[%s1 + $0x654] sm:$0xf]
  %v501 = vld [vmem:[%s1 + $0x658] sm:$0xf]
  %v502 = vld [vmem:[%s1 + $0x65c] sm:$0xf]
  %v503 = vld [vmem:[%s1 + $0x660] sm:$0xf]
  %v504 = vld [vmem:[%s1 + $0x664] sm:$0xf]
  %v505 = vld [vmem:[%s1 + $0x668] sm:$0xf]
  %v506 = vld [vmem:[%s1 + $0x66c] sm:$0xf]
  %v507 = vld [vmem:[%s1 + $0x670] sm:$0xf]
  %v508 = vld [vmem:[%s1 + $0x674] sm:$0xf]
  %v509 = vld [vmem:[%s1 + $0x678] sm:$0xf]
  %v510 = vld [vmem:[%s1 + $0x67c] sm:$0xf]
  %v511 = vld [vmem:[%s1 + $0x680] sm:$0xf]
  %v512 = vld [vmem:[%s1 + $0x684] sm:$0xf]
  %v513 = vld [vmem:[%s1 + $0x688] sm:$0xf]
  %v514 = vld [vmem:[%s1 + $0x68c] sm:$0xf]
  %v515 = vld [vmem:[%s1 + $0x690] sm:$0xf]
  %v516 = vld [vmem:[%s1 + $0x694] sm:$0xf]
  %v517 = vld [vmem:[%s1 + $0x698] sm:$0xf]
  %v518 = vld [vmem:[%s1 + $0x69c] sm:$0xf]
  %v519 = vld [vmem:[%s1 + $0x6a0] sm:$0xf]
  %v520 = vld [vmem:[%s1 + $0x6a4] sm:$0xf]
  %v521 = vld [vmem:[%s1 + $0x6a8] sm:$0xf]
  %v522 = vld [vmem:[%s1 + $0x6ac] sm:$0xf]
  %v523 = vld [vmem:[%s1 + $0x6b0] sm:$0xf]
  %v524 = vld [vmem:[%s1 + $0x6b4] sm:$0xf]
  %v525 = vld [vmem:[%s1 + $0x6b8] sm:$0xf]
  %v526 = vld [vmem:[%s1 + $0x6bc] sm:$0xf]
  %v527 = vld [vmem:[%s1 + $0x6c0] sm:$0xf]
  %v528 = vld [vmem:[%s1 + $0x6c4] sm:$0xf]
  %v529 = vld [vmem:[%s1 + $0x6c8] sm:$0xf]
  %v530 = vld [vmem:[%s1 + $0x6cc] sm:$0xf]
  %v531 = vld [vmem:[%s1 + $0x6d0] sm:$0xf]
  %v532 = vld [vmem:[%s1 + $0x6d4] sm:$0xf]
  %v533 = vld [vmem:[%s1 + $0x6d8] sm:$0xf]
  %v534 = vld [vmem:[%s1 + $0x6dc] sm:$0xf]
  %v535 = vld [vmem:[%s1 + $0x6e0] sm:$0xf]
  %v536 = vld [vmem:[%s1 + $0x6e4] sm:$0xf]
  %v537 = vld [vmem:[%s1 + $0x6e8] sm:$0xf]
  %v538 = vld [vmem:[%s1 + $0x6ec] sm:$0xf]
  %v539 = vld [vmem:[%s1 + $0x6f0] sm:$0xf]
  %v540 = vld [vmem:[%s1 + $0x6f4] sm:$0xf]
  %v541 = vld [vmem:[%s1 + $0x6f8] sm:$0xf]
  %v542 = vld [vmem:[%s1 + $0x6fc] sm:$0xf]
  %v543 = vld [vmem:[%s1 + $0x700] sm:$0xf]
  %v544 = vld [vmem:[%s1 + $0x704] sm:$0xf]
  %v545 = vld [vmem:[%s1 + $0x708] sm:$0xf]
  %v546 = vld [vmem:[%s1 + $0x70c] sm:$0xf]
  %v547 = vld [vmem:[%s1 + $0x710] sm:$0xf]
  %v548 = vld [vmem:[%s1 + $0x714] sm:$0xf]
  %v549 = vld [vmem:[%s1 + $0x718] sm:$0xf]
  %v550 = vld [vmem:[%s1 + $0x71c] sm:$0xf]
  %v551 = vld [vmem:[%s1 + $0x720] sm:$0xf]
  %v552 = vld [vmem:[%s1 + $0x724] sm:$0xf]
  %v553 = vld [vmem:[%s1 + $0x728] sm:$0xf]
  %v554 = vld [vmem:[%s1 + $0x72c] sm:$0xf]
  %v555 = vld [vmem:[%s1 + $0x730] sm:$0xf]
  %v556 = vld [vmem:[%s1 + $0x734] sm:$0xf]
  %v557 = vld [vmem:[%s1 + $0x738] sm:$0xf]
  %v558 = vld [vmem:[%s1 + $0x73c] sm:$0xf]
  %v559 = vld [vmem:[%s1 + $0x740] sm:$0xf]
  %v560 = vld [vmem:[%s1 + $0x744] sm:$0xf]
  %v561 = vld [vmem:[%s1 + $0x748] sm:$0xf]
  %v562 = vld [vmem:[%s1 + $0x74c] sm:$0xf]
  %v563 = vld [vmem:[%s1 + $0x750] sm:$0xf]
  %v564 = vld [vmem:[%s1 + $0x754] sm:$0xf]
  %v565 = vld [vmem:[%s1 + $0x758] sm:$0xf]
  %v566 = vld [vmem:[%s1 + $0x75c] sm:$0xf]
  %v567 = vld [vmem:[%s1 + $0x760] sm:$0xf]
  %v568 = vld [vmem:[%s1 + $0x764] sm:$0xf]
  %v569 = vld [vmem:[%s1 + $0x768] sm:$0xf]
  %v570 = vld [vmem:[%s1 + $0x76c] sm:$0xf]
  %v571 = vld [vmem:[%s1 + $0x770] sm:$0xf]
  %v572 = vld [vmem:[%s1 + $0x774] sm:$0xf]
  %v573 = vld [vmem:[%s1 + $0x778] sm:$0xf]
  %v574 = vld [vmem:[%s1 + $0x77c] sm:$0xf]
  %v575 = vld [vmem:[%s1 + $0x780] sm:$0xf]
  %v576 = vld [vmem:[%s1 + $0x784] sm:$0xf]
  %v577 = vld [vmem:[%s1 + $0x788] sm:$0xf]
  %v578 = vld [vmem:[%s1 + $0x78c] sm:$0xf]
  %v579 = vld [vmem:[%s1 + $0x790] sm:$0xf]
  %v580 = vld [vmem:[%s1 + $0x794] sm:$0xf]
  %v581 = vld [vmem:[%s1 + $0x798] sm:$0xf]
  %v582 = vld [vmem:[%s1 + $0x79c] sm:$0xf]
  %v583 = vld [vmem:[%s1 + $0x7a0] sm:$0xf]
  %v584 = vld [vmem:[%s1 + $0x7a4] sm:$0xf]
  %v585 = vld [vmem:[%s1 + $0x7a8] sm:$0xf]
  %v586 = vld [vmem:[%s1 + $0x7ac] sm:$0xf]
  %v587 = vld [vmem:[%s1 + $0x7b0] sm:$0xf]
  %v588 = vld [vmem:[%s1 + $0x7b4] sm:$0xf]
  %v589 = vld [vmem:[%s1 + $0x7b8] sm:$0xf]
  %v590 = vld [vmem:[%s1 + $0x7bc] sm:$0xf]
  %v591 = vld [vmem:[%s1 + $0x7c0] sm:$0xf]
  %v592 = vld [vmem:[%s1 + $0x7c4] sm:$0xf]
  %v593 = vld [vmem:[%s1 + $0x7c8] sm:$0xf]
  %v594 = vld [vmem:[%s1 + $0x7cc] sm:$0xf]
  %v595 = vld [vmem:[%s1 + $0x7d0] sm:$0xf]
  %v596 = vld [vmem:[%s1 + $0x7d4] sm:$0xf]
  %v597 = vld [vmem:[%s1 + $0x7d8] sm:$0xf]
  %v598 = vld [vmem:[%s1 + $0x7dc] sm:$0xf]
  %v599 = vld [vmem:[%s1 + $0x7e0] sm:$0xf]
  %v600 = vld [vmem:[%s1 + $0x7e4] sm:$0xf]
  %v601 = vld [vmem:[%s1 + $0x7e8] sm:$0xf]
  %v602 = vld [vmem:[%s1 + $0x7ec] sm:$0xf]
  %v603 = vld [vmem:[%s1 + $0x7f0] sm:$0xf]
  %v604 = vld [vmem:[%s1 + $0x7f4] sm:$0xf]
  %v605 = vld [vmem:[%s1 + $0x7f8] sm:$0xf]
  %v606 = vld [vmem:[%s1 + $0x7fc] sm:$0xf]
  %v607 = vld [vmem:[%s1 + $0x800] sm:$0xf]
  %v608 = vld [vmem:[%s1 + $0x804] sm:$0xf]
  %v609 = vld [vmem:[%s1 + $0x808] sm:$0xf]
  %v610 = vld [vmem:[%s1 + $0x80c] sm:$0xf]
  %v611 = vld [vmem:[%s1 + $0x810] sm:$0xf]
  %v612 = vld [vmem:[%s1 + $0x814] sm:$0xf]
  %v613 = vld [vmem:[%s1 + $0x818] sm:$0xf]
  %v614 = vld [vmem:[%s1 + $0x81c] sm:$0xf]
  %v615 = vld [vmem:[%s1 + $0x820] sm:$0xf]
  %v616 = vld [vmem:[%s1 + $0x824] sm:$0xf]
  %v617 = vld [vmem:[%s1 + $0x828] sm:$0xf]
  %v618 = vld [vmem:[%s1 + $0x82c] sm:$0xf]
  %v619 = vld [vmem:[%s1 + $0x830] sm:$0xf]
  %v620 = vld [vmem:[%s1 + $0x834] sm:$0xf]
  %v621 = vld [vmem:[%s1 + $0x838] sm:$0xf]
  %v622 = vld [vmem:[%s1 + $0x83c] sm:$0xf]
  %v623 = vld [vmem:[%s1 + $0x840] sm:$0xf]
  %v624 = vld [vmem:[%s1 + $0x844] sm:$0xf]
  %v625 = vld [vmem:[%s1 + $0x848] sm:$0xf]
  %v626 = vld [vmem:[%s1 + $0x84c] sm:$0xf]
  %v627 = vld [vmem:[%s1 + $0x850] sm:$0xf]
  %v628 = vld [vmem:[%s1 + $0x854] sm:$0xf]
  %v629 = vld [vmem:[%s1 + $0x858] sm:$0xf]
  %v630 = vld [vmem:[%s1 + $0x85c] sm:$0xf]
  %v631 = vld [vmem:[%s1 + $0x860] sm:$0xf]
  %v632 = vld [vmem:[%s1 + $0x864] sm:$0xf]
  %v633 = vld [vmem:[%s1 + $0x868] sm:$0xf]
  %v634 = vld [vmem:[%s1 + $0x86c] sm:$0xf]
  %v635 = vld [vmem:[%s1 + $0x870] sm:$0xf]
  %v636 = vld [vmem:[%s1 + $0x874] sm:$0xf]
  %v637 = vld [vmem:[%s1 + $0x878] sm:$0xf]
  %v638 = vld [vmem:[%s1 + $0x87c] sm:$0xf]
  %v639 = vld [vmem:[%s1 + $0x880] sm:$0xf]
  %v640 = vld [vmem:[%s1 + $0x884] sm:$0xf]
  %v641 = vld [vmem:[%s1 + $0x888] sm:$0xf]
  %v642 = vld [vmem:[%s1 + $0x88c] sm:$0xf]
  %v643 = vld [vmem:[%s1 + $0x890] sm:$0xf]
  %v644 = vld [vmem:[%s1 + $0x894] sm:$0xf]
  %v645 = vld [vmem:[%s1 + $0x898] sm:$0xf]
  %v646 = vld [vmem:[%s1 + $0x89c] sm:$0xf]
  %v647 = vld [vmem:[%s1 + $0x8a0] sm:$0xf]
  %v648 = vld [vmem:[%s1 + $0x8a4] sm:$0xf]
  %v649 = vld [vmem:[%s1 + $0x8a8] sm:$0xf]
  %v650 = vld [vmem:[%s1 + $0x8ac] sm:$0xf]
  %v651 = vld [vmem:[%s1 + $0x8b0] sm:$0xf]
  %v652 = vld [vmem:[%s1 + $0x8b4] sm:$0xf]
  %v653 = vld [vmem:[%s1 + $0x8b8] sm:$0xf]
  %v654 = vld [vmem:[%s1 + $0x8bc] sm:$0xf]
  %v655 = vld [vmem:[%s1 + $0x8c0] sm:$0xf]
  %v656 = vld [vmem:[%s1 + $0x8c4] sm:$0xf]
  %v657 = vld [vmem:[%s1 + $0x8c8] sm:$0xf]
  %v658 = vld [vmem:[%s1 + $0x8cc] sm:$0xf]
  %v659 = vld [vmem:[%s1 + $0x8d0] sm:$0xf]
  %v660 = vld [vmem:[%s1 + $0x8d4] sm:$0xf]
  %v661 = vld [vmem:[%s1 + $0x8d8] sm:$0xf]
  %v662 = vld [vmem:[%s1 + $0x8dc] sm:$0xf]
  %v663 = vld [vmem:[%s1 + $0x8e0] sm:$0xf]
  %v664 = vld [vmem:[%s1 + $0x8e4] sm:$0xf]
  %v665 = vld [vmem:[%s1 + $0x8e8] sm:$0xf]
  %v666 = vld [vmem:[%s1 + $0x8ec] sm:$0xf]
  %v667 = vld [vmem:[%s1 + $0x8f0] sm:$0xf]
  %v668 = vld [vmem:[%s1 + $0x8f4] sm:$0xf]
  %v669 = vld [vmem:[%s1 + $0x8f8] sm:$0xf]
  %v670 = vld [vmem:[%s1 + $0x8fc] sm:$0xf]
  %v671 = vld [vmem:[%s1 + $0x900] sm:$0xf]
  %v672 = vld [vmem:[%s1 + $0x904] sm:$0xf]
  %v673 = vld [vmem:[%s1 + $0x908] sm:$0xf]
  %v674 = vld [vmem:[%s1 + $0x90c] sm:$0xf]
  %v675 = vld [vmem:[%s1 + $0x910] sm:$0xf]
  %v676 = vld [vmem:[%s1 + $0x914] sm:$0xf]
  %v677 = vld [vmem:[%s1 + $0x918] sm:$0xf]
  %v678 = vld [vmem:[%s1 + $0x91c] sm:$0xf]
  %v679 = vld [vmem:[%s1 + $0x920] sm:$0xf]
  %v680 = vld [vmem:[%s1 + $0x924] sm:$0xf]
  %v681 = vld [vmem:[%s1 + $0x928] sm:$0xf]
  %v682 = vld [vmem:[%s1 + $0x92c] sm:$0xf]
  %v683 = vld [vmem:[%s1 + $0x930] sm:$0xf]
  %v684 = vld [vmem:[%s1 + $0x934] sm:$0xf]
  %v685 = vld [vmem:[%s1 + $0x938] sm:$0xf]
  %v686 = vld [vmem:[%s1 + $0x93c] sm:$0xf]
  %v687 = vld [vmem:[%s1 + $0x940] sm:$0xf]
  %v688 = vld [vmem:[%s1 + $0x944] sm:$0xf]
  %v689 = vld [vmem:[%s1 + $0x948] sm:$0xf]
  %v690 = vld [vmem:[%s1 + $0x94c] sm:$0xf]
  %v691 = vld [vmem:[%s1 + $0x950] sm:$0xf]
  %v692 = vld [vmem:[%s1 + $0x954] sm:$0xf]
  %v693 = vld [vmem:[%s1 + $0x958] sm:$0xf]
  %v694 = vld [vmem:[%s1 + $0x95c] sm:$0xf]
  %v695 = vld [vmem:[%s1 + $0x960] sm:$0xf]
  %v696 = vld [vmem:[%s1 + $0x964] sm:$0xf]
  %v697 = vld [vmem:[%s1 + $0x968] sm:$0xf]
  %v698 = vld [vmem:[%s1 + $0x96c] sm:$0xf]
  %v699 = vld [vmem:[%s1 + $0x970] sm:$0xf]
  %v700 = vld [vmem:[%s1 + $0x974] sm:$0xf]
  %v701 = vld [vmem:[%s1 + $0x978] sm:$0xf]
  %v702 = vld [vmem:[%s1 + $0x97c] sm:$0xf]
  %v703 = vld [vmem:[%s1 + $0x980] sm:$0xf]
  %v704 = vld [vmem:[%s1 + $0x984] sm:$0xf]
  %v705 = vld [vmem:[%s1 + $0x988] sm:$0xf]
  %v706 = vld [vmem:[%s1 + $0x98c] sm:$0xf]
  %v707 = vld [vmem:[%s1 + $0x990] sm:$0xf]
  %v708 = vld [vmem:[%s1 + $0x994] sm:$0xf]
  %v709 = vld [vmem:[%s1 + $0x998] sm:$0xf]
  %v710 = vld [vmem:[%s1 + $0x99c] sm:$0xf]
  %v711 = vld [vmem:[%s1 + $0x9a0] sm:$0xf]
  %v712 = vld [vmem:[%s1 + $0x9a4] sm:$0xf]
  %v713 = vld [vmem:[%s1 + $0x9a8] sm:$0xf]
  %v714 = vld [vmem:[%s1 + $0x9ac] sm:$0xf]
  %v715 = vld [vmem:[%s1 + $0x9b0] sm:$0xf]
  %v716 = vld [vmem:[%s1 + $0x9b4] sm:$0xf]
  %v717 = vld [vmem:[%s1 + $0x9b8] sm:$0xf]
  %v718 = vld [vmem:[%s1 + $0x9bc] sm:$0xf]
  %v719 = vld [vmem:[%s1 + $0x9c0] sm:$0xf]
  %v1345 = vunpack.c.l.b16 %v95
  %v1346 = vunpack.c.l.b16 %v96
  %v1347 = vunpack.c.l.b16 %v97
  %v1348 = vunpack.c.l.b16 %v98
  %v1349 = vunpack.c.l.b16 %v99
  %v1350 = vunpack.c.l.b16 %v100
  %v1351 = vunpack.c.l.b16 %v101
  %v1352 = vunpack.c.l.b16 %v102
  %v1353 = vunpack.c.l.b16 %v103
  %v1354 = vunpack.c.l.b16 %v104
  %v1355 = vunpack.c.l.b16 %v105
  %v1356 = vunpack.c.l.b16 %v106
  %v1357 = vunpack.c.l.b16 %v107
  %v1358 = vunpack.c.l.b16 %v108
  %v1359 = vunpack.c.l.b16 %v109
  %v1360 = vunpack.c.l.b16 %v110
  %v1361 = vunpack.c.l.b16 %v111
  %v1362 = vunpack.c.l.b16 %v112
  %v1363 = vunpack.c.l.b16 %v113
  %v1364 = vunpack.c.l.b16 %v114
  %v1365 = vunpack.c.l.b16 %v115
  %v1366 = vunpack.c.l.b16 %v116
  %v1367 = vunpack.c.l.b16 %v117
  %v1368 = vunpack.c.l.b16 %v118
  %v1369 = vunpack.c.l.b16 %v119
  %v1370 = vunpack.c.l.b16 %v120
  %v1371 = vunpack.c.l.b16 %v121
  %v1372 = vunpack.c.l.b16 %v122
  %v1373 = vunpack.c.l.b16 %v123
  %v1374 = vunpack.c.l.b16 %v124
  %v1375 = vunpack.c.l.b16 %v125
  %v1376 = vunpack.c.l.b16 %v126
  %v1377 = vunpack.c.l.b16 %v127
  %v1378 = vunpack.c.l.b16 %v128
  %v1379 = vunpack.c.l.b16 %v129
  %v1380 = vunpack.c.l.b16 %v130
  %v1381 = vunpack.c.l.b16 %v131
  %v1382 = vunpack.c.l.b16 %v132
  %v1383 = vunpack.c.l.b16 %v133
  %v1384 = vunpack.c.l.b16 %v134
  %v1385 = vunpack.c.l.b16 %v135
  %v1386 = vunpack.c.l.b16 %v136
  %v1387 = vunpack.c.l.b16 %v137
  %v1388 = vunpack.c.l.b16 %v138
  %v1389 = vunpack.c.l.b16 %v139
  %v1390 = vunpack.c.l.b16 %v140
  %v1391 = vunpack.c.l.b16 %v141
  %v1392 = vunpack.c.l.b16 %v142
  %v1393 = vunpack.c.l.b16 %v143
  %v1394 = vunpack.c.l.b16 %v144
  %v1395 = vunpack.c.l.b16 %v145
  %v1396 = vunpack.c.l.b16 %v146
  %v1397 = vunpack.c.l.b16 %v147
  %v1398 = vunpack.c.l.b16 %v148
  %v1399 = vunpack.c.l.b16 %v149
  %v1400 = vunpack.c.l.b16 %v150
  %v1401 = vunpack.c.l.b16 %v151
  %v1402 = vunpack.c.l.b16 %v152
  %v1403 = vunpack.c.l.b16 %v153
  %v1404 = vunpack.c.l.b16 %v154
  %v1405 = vunpack.c.l.b16 %v155
  %v1406 = vunpack.c.l.b16 %v156
  %v1407 = vunpack.c.l.b16 %v157
  %v1408 = vunpack.c.l.b16 %v158
  %v1409 = vunpack.c.l.b16 %v159
  %v1410 = vunpack.c.l.b16 %v160
  %v1411 = vunpack.c.l.b16 %v161
  %v1412 = vunpack.c.l.b16 %v162
  %v1413 = vunpack.c.l.b16 %v163
  %v1414 = vunpack.c.l.b16 %v164
  %v1415 = vunpack.c.l.b16 %v165
  %v1416 = vunpack.c.l.b16 %v166
  %v1417 = vunpack.c.l.b16 %v167
  %v1418 = vunpack.c.l.b16 %v168
  %v1419 = vunpack.c.l.b16 %v169
  %v1420 = vunpack.c.l.b16 %v170
  %v1421 = vunpack.c.l.b16 %v171
  %v1422 = vunpack.c.l.b16 %v172
  %v1423 = vunpack.c.l.b16 %v173
  %v1424 = vunpack.c.l.b16 %v174
  %v1425 = vunpack.c.l.b16 %v175
  %v1426 = vunpack.c.l.b16 %v176
  %v1427 = vunpack.c.l.b16 %v177
  %v1428 = vunpack.c.l.b16 %v178
  %v1429 = vunpack.c.l.b16 %v179
  %v1430 = vunpack.c.l.b16 %v180
  %v1431 = vunpack.c.l.b16 %v181
  %v1432 = vunpack.c.l.b16 %v182
  %v1433 = vunpack.c.l.b16 %v183
  %v1434 = vunpack.c.l.b16 %v184
  %v1435 = vunpack.c.l.b16 %v185
  %v1436 = vunpack.c.l.b16 %v186
  %v1437 = vunpack.c.l.b16 %v187
  %v1438 = vunpack.c.l.b16 %v188
  %v1439 = vunpack.c.l.b16 %v189
  %v1440 = vunpack.c.l.b16 %v190
  %v1441 = vunpack.c.l.b16 %v191
  %v1442 = vunpack.c.l.b16 %v192
  %v1443 = vunpack.c.l.b16 %v193
  %v1444 = vunpack.c.l.b16 %v194
  %v1445 = vunpack.c.l.b16 %v195
  %v1446 = vunpack.c.l.b16 %v196
  %v1447 = vunpack.c.l.b16 %v197
  %v1448 = vunpack.c.l.b16 %v198
  %v1449 = vunpack.c.l.b16 %v199
  %v1450 = vunpack.c.l.b16 %v200
  %v1451 = vunpack.c.l.b16 %v201
  %v1452 = vunpack.c.l.b16 %v202
  %v1453 = vunpack.c.l.b16 %v203
  %v1454 = vunpack.c.l.b16 %v204
  %v1455 = vunpack.c.l.b16 %v205
  %v1456 = vunpack.c.l.b16 %v206
  %v1457 = vunpack.c.l.b16 %v207
  %v1458 = vunpack.c.l.b16 %v208
  %v1459 = vunpack.c.l.b16 %v209
  %v1460 = vunpack.c.l.b16 %v210
  %v1461 = vunpack.c.l.b16 %v211
  %v1462 = vunpack.c.l.b16 %v212
  %v1463 = vunpack.c.l.b16 %v213
  %v1464 = vunpack.c.l.b16 %v214
  %v1465 = vunpack.c.l.b16 %v215
  %v1466 = vunpack.c.l.b16 %v216
  %v1467 = vunpack.c.l.b16 %v217
  %v1468 = vunpack.c.l.b16 %v218
  %v1469 = vunpack.c.l.b16 %v219
  %v1470 = vunpack.c.l.b16 %v220
  %v1471 = vunpack.c.l.b16 %v221
  %v1472 = vunpack.c.l.b16 %v222
  %v1473 = vunpack.c.l.b16 %v223
  %v1474 = vunpack.c.l.b16 %v224
  %v1475 = vunpack.c.l.b16 %v225
  %v1476 = vunpack.c.l.b16 %v226
  %v1477 = vunpack.c.l.b16 %v227
  %v1478 = vunpack.c.l.b16 %v228
  %v1479 = vunpack.c.l.b16 %v229
  %v1480 = vunpack.c.l.b16 %v230
  %v1481 = vunpack.c.l.b16 %v231
  %v1482 = vunpack.c.l.b16 %v232
  %v1483 = vunpack.c.l.b16 %v233
  %v1484 = vunpack.c.l.b16 %v234
  %v1485 = vunpack.c.l.b16 %v235
  %v1486 = vunpack.c.l.b16 %v236
  %v1487 = vunpack.c.l.b16 %v237
  %v1488 = vunpack.c.l.b16 %v238
  %v1489 = vunpack.c.l.b16 %v239
  %v1490 = vunpack.c.l.b16 %v240
  %v1491 = vunpack.c.l.b16 %v241
  %v1492 = vunpack.c.l.b16 %v242
  %v1493 = vunpack.c.l.b16 %v243
  %v1494 = vunpack.c.l.b16 %v244
  %v1495 = vunpack.c.l.b16 %v245
  %v1496 = vunpack.c.l.b16 %v246
  %v1497 = vunpack.c.l.b16 %v247
  %v1498 = vunpack.c.l.b16 %v248
  %v1499 = vunpack.c.l.b16 %v249
  %v1500 = vunpack.c.l.b16 %v250
  %v1501 = vunpack.c.l.b16 %v251
  %v1502 = vunpack.c.l.b16 %v252
  %v1503 = vunpack.c.l.b16 %v253
  %v1504 = vunpack.c.l.b16 %v254
  %v1505 = vunpack.c.l.b16 %v255
  %v1506 = vunpack.c.l.b16 %v256
  %v1507 = vunpack.c.l.b16 %v257
  %v1508 = vunpack.c.l.b16 %v258
  %v1509 = vunpack.c.l.b16 %v259
  %v1510 = vunpack.c.l.b16 %v260
  %v1511 = vunpack.c.l.b16 %v261
  %v1512 = vunpack.c.l.b16 %v262
  %v1513 = vunpack.c.l.b16 %v263
  %v1514 = vunpack.c.l.b16 %v264
  %v1515 = vunpack.c.l.b16 %v265
  %v1516 = vunpack.c.l.b16 %v266
  %v1517 = vunpack.c.l.b16 %v267
  %v1518 = vunpack.c.l.b16 %v268
  %v1519 = vunpack.c.l.b16 %v269
  %v1520 = vunpack.c.l.b16 %v270
  %v1521 = vunpack.c.l.b16 %v271
  %v1522 = vunpack.c.l.b16 %v272
  %v1523 = vunpack.c.l.b16 %v273
  %v1524 = vunpack.c.l.b16 %v274
  %v1525 = vunpack.c.l.b16 %v275
  %v1526 = vunpack.c.l.b16 %v276
  %v1527 = vunpack.c.l.b16 %v277
  %v1528 = vunpack.c.l.b16 %v278
  %v1529 = vunpack.c.l.b16 %v279
  %v1530 = vunpack.c.l.b16 %v280
  %v1531 = vunpack.c.l.b16 %v281
  %v1532 = vunpack.c.l.b16 %v282
  %v1533 = vunpack.c.l.b16 %v283
  %v1534 = vunpack.c.l.b16 %v284
  %v1535 = vunpack.c.l.b16 %v285
  %v1536 = vunpack.c.l.b16 %v286
  %v1537 = vunpack.c.l.b16 %v287
  %v1538 = vunpack.c.l.b16 %v288
  %v1539 = vunpack.c.l.b16 %v289
  %v1540 = vunpack.c.l.b16 %v290
  %v1541 = vunpack.c.l.b16 %v291
  %v1542 = vunpack.c.l.b16 %v292
  %v1543 = vunpack.c.l.b16 %v293
  %v1544 = vunpack.c.l.b16 %v294
  %v1545 = vunpack.c.l.b16 %v295
  %v1546 = vunpack.c.l.b16 %v296
  %v1547 = vunpack.c.l.b16 %v297
  %v1548 = vunpack.c.l.b16 %v298
  %v1549 = vunpack.c.l.b16 %v299
  %v1550 = vunpack.c.l.b16 %v300
  %v1551 = vunpack.c.l.b16 %v301
  %v1552 = vunpack.c.l.b16 %v302
  %v1553 = vunpack.c.l.b16 %v303
  %v1554 = vunpack.c.l.b16 %v304
  %v1555 = vunpack.c.l.b16 %v305
  %v1556 = vunpack.c.l.b16 %v306
  %v1557 = vunpack.c.l.b16 %v307
  %v1558 = vunpack.c.l.b16 %v308
  %v1559 = vunpack.c.l.b16 %v309
  %v1560 = vunpack.c.l.b16 %v310
  %v1561 = vunpack.c.l.b16 %v311
  %v1562 = vunpack.c.l.b16 %v312
  %v1563 = vunpack.c.l.b16 %v313
  %v1564 = vunpack.c.l.b16 %v314
  %v1565 = vunpack.c.l.b16 %v315
  %v1566 = vunpack.c.l.b16 %v316
  %v1567 = vunpack.c.l.b16 %v317
  %v1568 = vunpack.c.l.b16 %v318
  %v1569 = vunpack.c.l.b16 %v319
  %v1570 = vunpack.c.l.b16 %v320
  %v1571 = vunpack.c.l.b16 %v321
  %v1572 = vunpack.c.l.b16 %v322
  %v1573 = vunpack.c.l.b16 %v323
  %v1574 = vunpack.c.l.b16 %v324
  %v1575 = vunpack.c.l.b16 %v325
  %v1576 = vunpack.c.l.b16 %v326
  %v1577 = vunpack.c.l.b16 %v327
  %v1578 = vunpack.c.l.b16 %v328
  %v1579 = vunpack.c.l.b16 %v329
  %v1580 = vunpack.c.l.b16 %v330
  %v1581 = vunpack.c.l.b16 %v331
  %v1582 = vunpack.c.l.b16 %v332
  %v1583 = vunpack.c.l.b16 %v333
  %v1584 = vunpack.c.l.b16 %v334
  %v1585 = vunpack.c.l.b16 %v335
  %v1586 = vunpack.c.l.b16 %v336
  %v1587 = vunpack.c.l.b16 %v337
  %v1588 = vunpack.c.l.b16 %v338
  %v1589 = vunpack.c.l.b16 %v339
  %v1590 = vunpack.c.l.b16 %v340
  %v1591 = vunpack.c.l.b16 %v341
  %v1592 = vunpack.c.l.b16 %v342
  %v1593 = vunpack.c.l.b16 %v343
  %v1594 = vunpack.c.l.b16 %v344
  %v1595 = vunpack.c.l.b16 %v345
  %v1596 = vunpack.c.l.b16 %v346
  %v1597 = vunpack.c.l.b16 %v347
  %v1598 = vunpack.c.l.b16 %v348
  %v1599 = vunpack.c.l.b16 %v349
  %v1600 = vunpack.c.l.b16 %v350
  %v1601 = vunpack.c.l.b16 %v351
  %v1602 = vunpack.c.l.b16 %v352
  %v1603 = vunpack.c.l.b16 %v353
  %v1604 = vunpack.c.l.b16 %v354
  %v1605 = vunpack.c.l.b16 %v355
  %v1606 = vunpack.c.l.b16 %v356
  %v1607 = vunpack.c.l.b16 %v357
  %v1608 = vunpack.c.l.b16 %v358
  %v1609 = vunpack.c.l.b16 %v359
  %v1610 = vunpack.c.l.b16 %v360
  %v1611 = vunpack.c.l.b16 %v361
  %v1612 = vunpack.c.l.b16 %v362
  %v1613 = vunpack.c.l.b16 %v363
  %v1614 = vunpack.c.l.b16 %v364
  %v1615 = vunpack.c.l.b16 %v365
  %v1616 = vunpack.c.l.b16 %v366
  %v1617 = vunpack.c.l.b16 %v367
  %v1618 = vunpack.c.l.b16 %v368
  %v1619 = vunpack.c.l.b16 %v369
  %v1620 = vunpack.c.l.b16 %v370
  %v1621 = vunpack.c.l.b16 %v371
  %v1622 = vunpack.c.l.b16 %v372
  %v1623 = vunpack.c.l.b16 %v373
  %v1624 = vunpack.c.l.b16 %v374
  %v1625 = vunpack.c.l.b16 %v375
  %v1626 = vunpack.c.l.b16 %v376
  %v1627 = vunpack.c.l.b16 %v377
  %v1628 = vunpack.c.l.b16 %v378
  %v1629 = vunpack.c.l.b16 %v379
  %v1630 = vunpack.c.l.b16 %v380
  %v1631 = vunpack.c.l.b16 %v381
  %v1632 = vunpack.c.l.b16 %v382
  %v1633 = vunpack.c.l.b16 %v383
  %v1634 = vunpack.c.l.b16 %v384
  %v1635 = vunpack.c.l.b16 %v385
  %v1636 = vunpack.c.l.b16 %v386
  %v1637 = vunpack.c.l.b16 %v387
  %v1638 = vunpack.c.l.b16 %v388
  %v1639 = vunpack.c.l.b16 %v389
  %v1640 = vunpack.c.l.b16 %v390
  %v1641 = vunpack.c.l.b16 %v391
  %v1642 = vunpack.c.l.b16 %v392
  %v1643 = vunpack.c.l.b16 %v393
  %v1644 = vunpack.c.l.b16 %v394
  %v1645 = vunpack.c.l.b16 %v395
  %v1646 = vunpack.c.l.b16 %v396
  %v1647 = vunpack.c.l.b16 %v397
  %v1648 = vunpack.c.l.b16 %v398
  %v1649 = vunpack.c.l.b16 %v399
  %v1650 = vunpack.c.l.b16 %v400
  %v1651 = vunpack.c.l.b16 %v401
  %v1652 = vunpack.c.l.b16 %v402
  %v1653 = vunpack.c.l.b16 %v403
  %v1654 = vunpack.c.l.b16 %v404
  %v1655 = vunpack.c.l.b16 %v405
  %v1656 = vunpack.c.l.b16 %v406
  %v1657 = vunpack.c.l.b16 %v407
  %v1658 = vunpack.c.l.b16 %v408
  %v1659 = vunpack.c.l.b16 %v409
  %v1660 = vunpack.c.l.b16 %v410
  %v1661 = vunpack.c.l.b16 %v411
  %v1662 = vunpack.c.l.b16 %v412
  %v1663 = vunpack.c.l.b16 %v413
  %v1664 = vunpack.c.l.b16 %v414
  %v1665 = vunpack.c.l.b16 %v415
  %v1666 = vunpack.c.l.b16 %v416
  %v1667 = vunpack.c.l.b16 %v417
  %v1668 = vunpack.c.l.b16 %v418
  %v1669 = vunpack.c.l.b16 %v419
  %v1670 = vunpack.c.l.b16 %v420
  %v1671 = vunpack.c.l.b16 %v421
  %v1672 = vunpack.c.l.b16 %v422
  %v1673 = vunpack.c.l.b16 %v423
  %v1674 = vunpack.c.l.b16 %v424
  %v1675 = vunpack.c.l.b16 %v425
  %v1676 = vunpack.c.l.b16 %v426
  %v1677 = vunpack.c.l.b16 %v427
  %v1678 = vunpack.c.l.b16 %v428
  %v1679 = vunpack.c.l.b16 %v429
  %v1680 = vunpack.c.l.b16 %v430
  %v1681 = vunpack.c.l.b16 %v431
  %v1682 = vunpack.c.l.b16 %v432
  %v1683 = vunpack.c.l.b16 %v433
  %v1684 = vunpack.c.l.b16 %v434
  %v1685 = vunpack.c.l.b16 %v435
  %v1686 = vunpack.c.l.b16 %v436
  %v1687 = vunpack.c.l.b16 %v437
  %v1688 = vunpack.c.l.b16 %v438
  %v1689 = vunpack.c.l.b16 %v439
  %v1690 = vunpack.c.l.b16 %v440
  %v1691 = vunpack.c.l.b16 %v441
  %v1692 = vunpack.c.l.b16 %v442
  %v1693 = vunpack.c.l.b16 %v443
  %v1694 = vunpack.c.l.b16 %v444
  %v1695 = vunpack.c.l.b16 %v445
  %v1696 = vunpack.c.l.b16 %v446
  %v1697 = vunpack.c.l.b16 %v447
  %v1698 = vunpack.c.l.b16 %v448
  %v1699 = vunpack.c.l.b16 %v449
  %v1700 = vunpack.c.l.b16 %v450
  %v1701 = vunpack.c.l.b16 %v451
  %v1702 = vunpack.c.l.b16 %v452
  %v1703 = vunpack.c.l.b16 %v453
  %v1704 = vunpack.c.l.b16 %v454
  %v1705 = vunpack.c.l.b16 %v455
  %v1706 = vunpack.c.l.b16 %v456
  %v1707 = vunpack.c.l.b16 %v457
  %v1708 = vunpack.c.l.b16 %v458
  %v1709 = vunpack.c.l.b16 %v459
  %v1710 = vunpack.c.l.b16 %v460
  %v1711 = vunpack.c.l.b16 %v461
  %v1712 = vunpack.c.l.b16 %v462
  %v1713 = vunpack.c.l.b16 %v463
  %v1714 = vunpack.c.l.b16 %v464
  %v1715 = vunpack.c.l.b16 %v465
  %v1716 = vunpack.c.l.b16 %v466
  %v1717 = vunpack.c.l.b16 %v467
  %v1718 = vunpack.c.l.b16 %v468
  %v1719 = vunpack.c.l.b16 %v469
  %v1720 = vunpack.c.l.b16 %v470
  %v1721 = vunpack.c.l.b16 %v471
  %v1722 = vunpack.c.l.b16 %v472
  %v1723 = vunpack.c.l.b16 %v473
  %v1724 = vunpack.c.l.b16 %v474
  %v1725 = vunpack.c.l.b16 %v475
  %v1726 = vunpack.c.l.b16 %v476
  %v1727 = vunpack.c.l.b16 %v477
  %v1728 = vunpack.c.l.b16 %v478
  %v1729 = vunpack.c.l.b16 %v479
  %v1730 = vunpack.c.l.b16 %v480
  %v1731 = vunpack.c.l.b16 %v481
  %v1732 = vunpack.c.l.b16 %v482
  %v1733 = vunpack.c.l.b16 %v483
  %v1734 = vunpack.c.l.b16 %v484
  %v1735 = vunpack.c.l.b16 %v485
  %v1736 = vunpack.c.l.b16 %v486
  %v1737 = vunpack.c.l.b16 %v487
  %v1738 = vunpack.c.l.b16 %v488
  %v1739 = vunpack.c.l.b16 %v489
  %v1740 = vunpack.c.l.b16 %v490
  %v1741 = vunpack.c.l.b16 %v491
  %v1742 = vunpack.c.l.b16 %v492
  %v1743 = vunpack.c.l.b16 %v493
  %v1744 = vunpack.c.l.b16 %v494
  %v1745 = vunpack.c.l.b16 %v495
  %v1746 = vunpack.c.l.b16 %v496
  %v1747 = vunpack.c.l.b16 %v497
  %v1748 = vunpack.c.l.b16 %v498
  %v1749 = vunpack.c.l.b16 %v499
  %v1750 = vunpack.c.l.b16 %v500
  %v1751 = vunpack.c.l.b16 %v501
  %v1752 = vunpack.c.l.b16 %v502
  %v1753 = vunpack.c.l.b16 %v503
  %v1754 = vunpack.c.l.b16 %v504
  %v1755 = vunpack.c.l.b16 %v505
  %v1756 = vunpack.c.l.b16 %v506
  %v1757 = vunpack.c.l.b16 %v507
  %v1758 = vunpack.c.l.b16 %v508
  %v1759 = vunpack.c.l.b16 %v509
  %v1760 = vunpack.c.l.b16 %v510
  %v1761 = vunpack.c.l.b16 %v511
  %v1762 = vunpack.c.l.b16 %v512
  %v1763 = vunpack.c.l.b16 %v513
  %v1764 = vunpack.c.l.b16 %v514
  %v1765 = vunpack.c.l.b16 %v515
  %v1766 = vunpack.c.l.b16 %v516
  %v1767 = vunpack.c.l.b16 %v517
  %v1768 = vunpack.c.l.b16 %v518
  %v1769 = vunpack.c.l.b16 %v519
  %v1770 = vunpack.c.l.b16 %v520
  %v1771 = vunpack.c.l.b16 %v521
  %v1772 = vunpack.c.l.b16 %v522
  %v1773 = vunpack.c.l.b16 %v523
  %v1774 = vunpack.c.l.b16 %v524
  %v1775 = vunpack.c.l.b16 %v525
  %v1776 = vunpack.c.l.b16 %v526
  %v1777 = vunpack.c.l.b16 %v527
  %v1778 = vunpack.c.l.b16 %v528
  %v1779 = vunpack.c.l.b16 %v529
  %v1780 = vunpack.c.l.b16 %v530
  %v1781 = vunpack.c.l.b16 %v531
  %v1782 = vunpack.c.l.b16 %v532
  %v1783 = vunpack.c.l.b16 %v533
  %v1784 = vunpack.c.l.b16 %v534
  %v1785 = vunpack.c.l.b16 %v535
  %v1786 = vunpack.c.l.b16 %v536
  %v1787 = vunpack.c.l.b16 %v537
  %v1788 = vunpack.c.l.b16 %v538
  %v1789 = vunpack.c.l.b16 %v539
  %v1790 = vunpack.c.l.b16 %v540
  %v1791 = vunpack.c.l.b16 %v541
  %v1792 = vunpack.c.l.b16 %v542
  %v1793 = vunpack.c.l.b16 %v543
  %v1794 = vunpack.c.l.b16 %v544
  %v1795 = vunpack.c.l.b16 %v545
  %v1796 = vunpack.c.l.b16 %v546
  %v1797 = vunpack.c.l.b16 %v547
  %v1798 = vunpack.c.l.b16 %v548
  %v1799 = vunpack.c.l.b16 %v549
  %v1800 = vunpack.c.l.b16 %v550
  %v1801 = vunpack.c.l.b16 %v551
  %v1802 = vunpack.c.l.b16 %v552
  %v1803 = vunpack.c.l.b16 %v553
  %v1804 = vunpack.c.l.b16 %v554
  %v1805 = vunpack.c.l.b16 %v555
  %v1806 = vunpack.c.l.b16 %v556
  %v1807 = vunpack.c.l.b16 %v557
  %v1808 = vunpack.c.l.b16 %v558
  %v1809 = vunpack.c.l.b16 %v559
  %v1810 = vunpack.c.l.b16 %v560
  %v1811 = vunpack.c.l.b16 %v561
  %v1812 = vunpack.c.l.b16 %v562
  %v1813 = vunpack.c.l.b16 %v563
  %v1814 = vunpack.c.l.b16 %v564
  %v1815 = vunpack.c.l.b16 %v565
  %v1816 = vunpack.c.l.b16 %v566
  %v1817 = vunpack.c.l.b16 %v567
  %v1818 = vunpack.c.l.b16 %v568
  %v1819 = vunpack.c.l.b16 %v569
  %v1820 = vunpack.c.l.b16 %v570
  %v1821 = vunpack.c.l.b16 %v571
  %v1822 = vunpack.c.l.b16 %v572
  %v1823 = vunpack.c.l.b16 %v573
  %v1824 = vunpack.c.l.b16 %v574
  %v1825 = vunpack.c.l.b16 %v575
  %v1826 = vunpack.c.l.b16 %v576
  %v1827 = vunpack.c.l.b16 %v577
  %v1828 = vunpack.c.l.b16 %v578
  %v1829 = vunpack.c.l.b16 %v579
  %v1830 = vunpack.c.l.b16 %v580
  %v1831 = vunpack.c.l.b16 %v581
  %v1832 = vunpack.c.l.b16 %v582
  %v1833 = vunpack.c.l.b16 %v583
  %v1834 = vunpack.c.l.b16 %v584
  %v1835 = vunpack.c.l.b16 %v585
  %v1836 = vunpack.c.l.b16 %v586
  %v1837 = vunpack.c.l.b16 %v587
  %v1838 = vunpack.c.l.b16 %v588
  %v1839 = vunpack.c.l.b16 %v589
  %v1840 = vunpack.c.l.b16 %v590
  %v1841 = vunpack.c.l.b16 %v591
  %v1842 = vunpack.c.l.b16 %v592
  %v1843 = vunpack.c.l.b16 %v593
  %v1844 = vunpack.c.l.b16 %v594
  %v1845 = vunpack.c.l.b16 %v595
  %v1846 = vunpack.c.l.b16 %v596
  %v1847 = vunpack.c.l.b16 %v597
  %v1848 = vunpack.c.l.b16 %v598
  %v1849 = vunpack.c.l.b16 %v599
  %v1850 = vunpack.c.l.b16 %v600
  %v1851 = vunpack.c.l.b16 %v601
  %v1852 = vunpack.c.l.b16 %v602
  %v1853 = vunpack.c.l.b16 %v603
  %v1854 = vunpack.c.l.b16 %v604
  %v1855 = vunpack.c.l.b16 %v605
  %v1856 = vunpack.c.l.b16 %v606
  %v1857 = vunpack.c.l.b16 %v607
  %v1858 = vunpack.c.l.b16 %v608
  %v1859 = vunpack.c.l.b16 %v609
  %v1860 = vunpack.c.l.b16 %v610
  %v1861 = vunpack.c.l.b16 %v611
  %v1862 = vunpack.c.l.b16 %v612
  %v1863 = vunpack.c.l.b16 %v613
  %v1864 = vunpack.c.l.b16 %v614
  %v1865 = vunpack.c.l.b16 %v615
  %v1866 = vunpack.c.l.b16 %v616
  %v1867 = vunpack.c.l.b16 %v617
  %v1868 = vunpack.c.l.b16 %v618
  %v1869 = vunpack.c.l.b16 %v619
  %v1870 = vunpack.c.l.b16 %v620
  %v1871 = vunpack.c.l.b16 %v621
  %v1872 = vunpack.c.l.b16 %v622
  %v1873 = vunpack.c.l.b16 %v623
  %v1874 = vunpack.c.l.b16 %v624
  %v1875 = vunpack.c.l.b16 %v625
  %v1876 = vunpack.c.l.b16 %v626
  %v1877 = vunpack.c.l.b16 %v627
  %v1878 = vunpack.c.l.b16 %v628
  %v1879 = vunpack.c.l.b16 %v629
  %v1880 = vunpack.c.l.b16 %v630
  %v1881 = vunpack.c.l.b16 %v631
  %v1882 = vunpack.c.l.b16 %v632
  %v1883 = vunpack.c.l.b16 %v633
  %v1884 = vunpack.c.l.b16 %v634
  %v1885 = vunpack.c.l.b16 %v635
  %v1886 = vunpack.c.l.b16 %v636
  %v1887 = vunpack.c.l.b16 %v637
  %v1888 = vunpack.c.l.b16 %v638
  %v1889 = vunpack.c.l.b16 %v639
  %v1890 = vunpack.c.l.b16 %v640
  %v1891 = vunpack.c.l.b16 %v641
  %v1892 = vunpack.c.l.b16 %v642
  %v1893 = vunpack.c.l.b16 %v643
  %v1894 = vunpack.c.l.b16 %v644
  %v1895 = vunpack.c.l.b16 %v645
  %v1896 = vunpack.c.l.b16 %v646
  %v1897 = vunpack.c.l.b16 %v647
  %v1898 = vunpack.c.l.b16 %v648
  %v1899 = vunpack.c.l.b16 %v649
  %v1900 = vunpack.c.l.b16 %v650
  %v1901 = vunpack.c.l.b16 %v651
  %v1902 = vunpack.c.l.b16 %v652
  %v1903 = vunpack.c.l.b16 %v653
  %v1904 = vunpack.c.l.b16 %v654
  %v1905 = vunpack.c.l.b16 %v655
  %v1906 = vunpack.c.l.b16 %v656
  %v1907 = vunpack.c.l.b16 %v657
  %v1908 = vunpack.c.l.b16 %v658
  %v1909 = vunpack.c.l.b16 %v659
  %v1910 = vunpack.c.l.b16 %v660
  %v1911 = vunpack.c.l.b16 %v661
  %v1912 = vunpack.c.l.b16 %v662
  %v1913 = vunpack.c.l.b16 %v663
  %v1914 = vunpack.c.l.b16 %v664
  %v1915 = vunpack.c.l.b16 %v665
  %v1916 = vunpack.c.l.b16 %v666
  %v1917 = vunpack.c.l.b16 %v667
  %v1918 = vunpack.c.l.b16 %v668
  %v1919 = vunpack.c.l.b16 %v669
  %v1920 = vunpack.c.l.b16 %v670
  %v1921 = vunpack.c.l.b16 %v671
  %v1922 = vunpack.c.l.b16 %v672
  %v1923 = vunpack.c.l.b16 %v673
  %v1924 = vunpack.c.l.b16 %v674
  %v1925 = vunpack.c.l.b16 %v675
  %v1926 = vunpack.c.l.b16 %v676
  %v1927 = vunpack.c.l.b16 %v677
  %v1928 = vunpack.c.l.b16 %v678
  %v1929 = vunpack.c.l.b16 %v679
  %v1930 = vunpack.c.l.b16 %v680
  %v1931 = vunpack.c.l.b16 %v681
  %v1932 = vunpack.c.l.b16 %v682
  %v1933 = vunpack.c.l.b16 %v683
  %v1934 = vunpack.c.l.b16 %v684
  %v1935 = vunpack.c.l.b16 %v685
  %v1936 = vunpack.c.l.b16 %v686
  %v1937 = vunpack.c.l.b16 %v687
  %v1938 = vunpack.c.l.b16 %v688
  %v1939 = vunpack.c.l.b16 %v689
  %v1940 = vunpack.c.l.b16 %v690
  %v1941 = vunpack.c.l.b16 %v691
  %v1942 = vunpack.c.l.b16 %v692
  %v1943 = vunpack.c.l.b16 %v693
  %v1944 = vunpack.c.l.b16 %v694
  %v1945 = vunpack.c.l.b16 %v695
  %v1946 = vunpack.c.l.b16 %v696
  %v1947 = vunpack.c.l.b16 %v697
  %v1948 = vunpack.c.l.b16 %v698
  %v1949 = vunpack.c.l.b16 %v699
  %v1950 = vunpack.c.l.b16 %v700
  %v1951 = vunpack.c.l.b16 %v701
  %v1952 = vunpack.c.l.b16 %v702
  %v1953 = vunpack.c.l.b16 %v703
  %v1954 = vunpack.c.l.b16 %v704
  %v1955 = vunpack.c.l.b16 %v705
  %v1956 = vunpack.c.l.b16 %v706
  %v1957 = vunpack.c.l.b16 %v707
  %v1958 = vunpack.c.l.b16 %v708
  %v1959 = vunpack.c.l.b16 %v709
  %v1960 = vunpack.c.l.b16 %v710
  %v1961 = vunpack.c.l.b16 %v711
  %v1962 = vunpack.c.l.b16 %v712
  %v1963 = vunpack.c.l.b16 %v713
  %v1964 = vunpack.c.l.b16 %v714
  %v1965 = vunpack.c.l.b16 %v715
  %v1966 = vunpack.c.l.b16 %v716
  %v1967 = vunpack.c.l.b16 %v717
  %v1968 = vunpack.c.l.b16 %v718
  %v1969 = vunpack.c.l.b16 %v719
  %v1970 = vpack.c.b16 %v1346, %v1345
  %v1971 = vpack.c.b16 %v1348, %v1347
  %v1972 = vpack.c.b16 %v1350, %v1349
  %v1973 = vpack.c.b16 %v1352, %v1351
  %v1974 = vpack.c.b16 %v1354, %v1353
  %v1975 = vpack.c.b16 %v1356, %v1355
  %v1976 = vpack.c.b16 %v1358, %v1357
  %v1977 = vpack.c.b16 %v1360, %v1359
  %v1978 = vpack.c.b16 %v1362, %v1361
  %v1979 = vpack.c.b16 %v1364, %v1363
  %v1980 = vpack.c.b16 %v1366, %v1365
  %v1981 = vpack.c.b16 %v1368, %v1367
  %v1982 = vpack.c.b16 %v1370, %v1369
  %v1983 = vpack.c.b16 %v1372, %v1371
  %v1984 = vpack.c.b16 %v1374, %v1373
  %v1985 = vpack.c.b16 %v1376, %v1375
  %v1986 = vpack.c.b16 %v1378, %v1377
  %v1987 = vpack.c.b16 %v1380, %v1379
  %v1988 = vpack.c.b16 %v1382, %v1381
  %v1989 = vpack.c.b16 %v1384, %v1383
  %v1990 = vpack.c.b16 %v1386, %v1385
  %v1991 = vpack.c.b16 %v1388, %v1387
  %v1992 = vpack.c.b16 %v1390, %v1389
  %v1993 = vpack.c.b16 %v1392, %v1391
  %v1994 = vpack.c.b16 %v1394, %v1393
  %v1995 = vpack.c.b16 %v1396, %v1395
  %v1996 = vpack.c.b16 %v1398, %v1397
  %v1997 = vpack.c.b16 %v1400, %v1399
  %v1998 = vpack.c.b16 %v1402, %v1401
  %v1999 = vpack.c.b16 %v1404, %v1403
  %v2000 = vpack.c.b16 %v1406, %v1405
  %v2001 = vpack.c.b16 %v1408, %v1407
  %v2002 = vpack.c.b16 %v1410, %v1409
  %v2003 = vpack.c.b16 %v1412, %v1411
  %v2004 = vpack.c.b16 %v1414, %v1413
  %v2005 = vpack.c.b16 %v1416, %v1415
  %v2006 = vpack.c.b16 %v1418, %v1417
  %v2007 = vpack.c.b16 %v1420, %v1419
  %v2008 = vpack.c.b16 %v1422, %v1421
  %v2009 = vpack.c.b16 %v1424, %v1423
  %v2010 = vpack.c.b16 %v1426, %v1425
  %v2011 = vpack.c.b16 %v1428, %v1427
  %v2012 = vpack.c.b16 %v1430, %v1429
  %v2013 = vpack.c.b16 %v1432, %v1431
  %v2014 = vpack.c.b16 %v1434, %v1433
  %v2015 = vpack.c.b16 %v1436, %v1435
  %v2016 = vpack.c.b16 %v1438, %v1437
  %v2017 = vpack.c.b16 %v1440, %v1439
  %v2018 = vpack.c.b16 %v1442, %v1441
  %v2019 = vpack.c.b16 %v1444, %v1443
  %v2020 = vpack.c.b16 %v1446, %v1445
  %v2021 = vpack.c.b16 %v1448, %v1447
  %v2022 = vpack.c.b16 %v1450, %v1449
  %v2023 = vpack.c.b16 %v1452, %v1451
  %v2024 = vpack.c.b16 %v1454, %v1453
  %v2025 = vpack.c.b16 %v1456, %v1455
  %v2026 = vpack.c.b16 %v1458, %v1457
  %v2027 = vpack.c.b16 %v1460, %v1459
  %v2028 = vpack.c.b16 %v1462, %v1461
  %v2029 = vpack.c.b16 %v1464, %v1463
  %v2030 = vpack.c.b16 %v1466, %v1465
  %v2031 = vpack.c.b16 %v1468, %v1467
  %v2032 = vpack.c.b16 %v1470, %v1469
  %v2033 = vpack.c.b16 %v1472, %v1471
  %v2034 = vpack.c.b16 %v1474, %v1473
  %v2035 = vpack.c.b16 %v1476, %v1475
  %v2036 = vpack.c.b16 %v1478, %v1477
  %v2037 = vpack.c.b16 %v1480, %v1479
  %v2038 = vpack.c.b16 %v1482, %v1481
  %v2039 = vpack.c.b16 %v1484, %v1483
  %v2040 = vpack.c.b16 %v1486, %v1485
  %v2041 = vpack.c.b16 %v1488, %v1487
  %v2042 = vpack.c.b16 %v1490, %v1489
  %v2043 = vpack.c.b16 %v1492, %v1491
  %v2044 = vpack.c.b16 %v1494, %v1493
  %v2045 = vpack.c.b16 %v1496, %v1495
  %v2046 = vpack.c.b16 %v1498, %v1497
  %v2047 = vpack.c.b16 %v1500, %v1499
  %v2048 = vpack.c.b16 %v1502, %v1501
  %v2049 = vpack.c.b16 %v1504, %v1503
  %v2050 = vpack.c.b16 %v1506, %v1505
  %v2051 = vpack.c.b16 %v1508, %v1507
  %v2052 = vpack.c.b16 %v1510, %v1509
  %v2053 = vpack.c.b16 %v1512, %v1511
  %v2054 = vpack.c.b16 %v1514, %v1513
  %v2055 = vpack.c.b16 %v1516, %v1515
  %v2056 = vpack.c.b16 %v1518, %v1517
  %v2057 = vpack.c.b16 %v1520, %v1519
  %v2058 = vpack.c.b16 %v1522, %v1521
  %v2059 = vpack.c.b16 %v1524, %v1523
  %v2060 = vpack.c.b16 %v1526, %v1525
  %v2061 = vpack.c.b16 %v1528, %v1527
  %v2062 = vpack.c.b16 %v1530, %v1529
  %v2063 = vpack.c.b16 %v1532, %v1531
  %v2064 = vpack.c.b16 %v1534, %v1533
  %v2065 = vpack.c.b16 %v1536, %v1535
  %v2066 = vpack.c.b16 %v1538, %v1537
  %v2067 = vpack.c.b16 %v1540, %v1539
  %v2068 = vpack.c.b16 %v1542, %v1541
  %v2069 = vpack.c.b16 %v1544, %v1543
  %v2070 = vpack.c.b16 %v1546, %v1545
  %v2071 = vpack.c.b16 %v1548, %v1547
  %v2072 = vpack.c.b16 %v1550, %v1549
  %v2073 = vpack.c.b16 %v1552, %v1551
  %v2074 = vpack.c.b16 %v1554, %v1553
  %v2075 = vpack.c.b16 %v1556, %v1555
  %v2076 = vpack.c.b16 %v1558, %v1557
  %v2077 = vpack.c.b16 %v1560, %v1559
  %v2078 = vpack.c.b16 %v1562, %v1561
  %v2079 = vpack.c.b16 %v1564, %v1563
  %v2080 = vpack.c.b16 %v1566, %v1565
  %v2081 = vpack.c.b16 %v1568, %v1567
  %v2082 = vpack.c.b16 %v1570, %v1569
  %v2083 = vpack.c.b16 %v1572, %v1571
  %v2084 = vpack.c.b16 %v1574, %v1573
  %v2085 = vpack.c.b16 %v1576, %v1575
  %v2086 = vpack.c.b16 %v1578, %v1577
  %v2087 = vpack.c.b16 %v1580, %v1579
  %v2088 = vpack.c.b16 %v1582, %v1581
  %v2089 = vpack.c.b16 %v1584, %v1583
  %v2090 = vpack.c.b16 %v1586, %v1585
  %v2091 = vpack.c.b16 %v1588, %v1587
  %v2092 = vpack.c.b16 %v1590, %v1589
  %v2093 = vpack.c.b16 %v1592, %v1591
  %v2094 = vpack.c.b16 %v1594, %v1593
  %v2095 = vpack.c.b16 %v1596, %v1595
  %v2096 = vpack.c.b16 %v1598, %v1597
  %v2097 = vpack.c.b16 %v1600, %v1599
  %v2098 = vpack.c.b16 %v1602, %v1601
  %v2099 = vpack.c.b16 %v1604, %v1603
  %v2100 = vpack.c.b16 %v1606, %v1605
  %v2101 = vpack.c.b16 %v1608, %v1607
  %v2102 = vpack.c.b16 %v1610, %v1609
  %v2103 = vpack.c.b16 %v1612, %v1611
  %v2104 = vpack.c.b16 %v1614, %v1613
  %v2105 = vpack.c.b16 %v1616, %v1615
  %v2106 = vpack.c.b16 %v1618, %v1617
  %v2107 = vpack.c.b16 %v1620, %v1619
  %v2108 = vpack.c.b16 %v1622, %v1621
  %v2109 = vpack.c.b16 %v1624, %v1623
  %v2110 = vpack.c.b16 %v1626, %v1625
  %v2111 = vpack.c.b16 %v1628, %v1627
  %v2112 = vpack.c.b16 %v1630, %v1629
  %v2113 = vpack.c.b16 %v1632, %v1631
  %v2114 = vpack.c.b16 %v1634, %v1633
  %v2115 = vpack.c.b16 %v1636, %v1635
  %v2116 = vpack.c.b16 %v1638, %v1637
  %v2117 = vpack.c.b16 %v1640, %v1639
  %v2118 = vpack.c.b16 %v1642, %v1641
  %v2119 = vpack.c.b16 %v1644, %v1643
  %v2120 = vpack.c.b16 %v1646, %v1645
  %v2121 = vpack.c.b16 %v1648, %v1647
  %v2122 = vpack.c.b16 %v1650, %v1649
  %v2123 = vpack.c.b16 %v1652, %v1651
  %v2124 = vpack.c.b16 %v1654, %v1653
  %v2125 = vpack.c.b16 %v1656, %v1655
  %v2126 = vpack.c.b16 %v1658, %v1657
  %v2127 = vpack.c.b16 %v1660, %v1659
  %v2128 = vpack.c.b16 %v1662, %v1661
  %v2129 = vpack.c.b16 %v1664, %v1663
  %v2130 = vpack.c.b16 %v1666, %v1665
  %v2131 = vpack.c.b16 %v1668, %v1667
  %v2132 = vpack.c.b16 %v1670, %v1669
  %v2133 = vpack.c.b16 %v1672, %v1671
  %v2134 = vpack.c.b16 %v1674, %v1673
  %v2135 = vpack.c.b16 %v1676, %v1675
  %v2136 = vpack.c.b16 %v1678, %v1677
  %v2137 = vpack.c.b16 %v1680, %v1679
  %v2138 = vpack.c.b16 %v1682, %v1681
  %v2139 = vpack.c.b16 %v1684, %v1683
  %v2140 = vpack.c.b16 %v1686, %v1685
  %v2141 = vpack.c.b16 %v1688, %v1687
  %v2142 = vpack.c.b16 %v1690, %v1689
  %v2143 = vpack.c.b16 %v1692, %v1691
  %v2144 = vpack.c.b16 %v1694, %v1693
  %v2145 = vpack.c.b16 %v1696, %v1695
  %v2146 = vpack.c.b16 %v1698, %v1697
  %v2147 = vpack.c.b16 %v1700, %v1699
  %v2148 = vpack.c.b16 %v1702, %v1701
  %v2149 = vpack.c.b16 %v1704, %v1703
  %v2150 = vpack.c.b16 %v1706, %v1705
  %v2151 = vpack.c.b16 %v1708, %v1707
  %v2152 = vpack.c.b16 %v1710, %v1709
  %v2153 = vpack.c.b16 %v1712, %v1711
  %v2154 = vpack.c.b16 %v1714, %v1713
  %v2155 = vpack.c.b16 %v1716, %v1715
  %v2156 = vpack.c.b16 %v1718, %v1717
  %v2157 = vpack.c.b16 %v1720, %v1719
  %v2158 = vpack.c.b16 %v1722, %v1721
  %v2159 = vpack.c.b16 %v1724, %v1723
  %v2160 = vpack.c.b16 %v1726, %v1725
  %v2161 = vpack.c.b16 %v1728, %v1727
  %v2162 = vpack.c.b16 %v1730, %v1729
  %v2163 = vpack.c.b16 %v1732, %v1731
  %v2164 = vpack.c.b16 %v1734, %v1733
  %v2165 = vpack.c.b16 %v1736, %v1735
  %v2166 = vpack.c.b16 %v1738, %v1737
  %v2167 = vpack.c.b16 %v1740, %v1739
  %v2168 = vpack.c.b16 %v1742, %v1741
  %v2169 = vpack.c.b16 %v1744, %v1743
  %v2170 = vpack.c.b16 %v1746, %v1745
  %v2171 = vpack.c.b16 %v1748, %v1747
  %v2172 = vpack.c.b16 %v1750, %v1749
  %v2173 = vpack.c.b16 %v1752, %v1751
  %v2174 = vpack.c.b16 %v1754, %v1753
  %v2175 = vpack.c.b16 %v1756, %v1755
  %v2176 = vpack.c.b16 %v1758, %v1757
  %v2177 = vpack.c.b16 %v1760, %v1759
  %v2178 = vpack.c.b16 %v1762, %v1761
  %v2179 = vpack.c.b16 %v1764, %v1763
  %v2180 = vpack.c.b16 %v1766, %v1765
  %v2181 = vpack.c.b16 %v1768, %v1767
  %v2182 = vpack.c.b16 %v1770, %v1769
  %v2183 = vpack.c.b16 %v1772, %v1771
  %v2184 = vpack.c.b16 %v1774, %v1773
  %v2185 = vpack.c.b16 %v1776, %v1775
  %v2186 = vpack.c.b16 %v1778, %v1777
  %v2187 = vpack.c.b16 %v1780, %v1779
  %v2188 = vpack.c.b16 %v1782, %v1781
  %v2189 = vpack.c.b16 %v1784, %v1783
  %v2190 = vpack.c.b16 %v1786, %v1785
  %v2191 = vpack.c.b16 %v1788, %v1787
  %v2192 = vpack.c.b16 %v1790, %v1789
  %v2193 = vpack.c.b16 %v1792, %v1791
  %v2194 = vpack.c.b16 %v1794, %v1793
  %v2195 = vpack.c.b16 %v1796, %v1795
  %v2196 = vpack.c.b16 %v1798, %v1797
  %v2197 = vpack.c.b16 %v1800, %v1799
  %v2198 = vpack.c.b16 %v1802, %v1801
  %v2199 = vpack.c.b16 %v1804, %v1803
  %v2200 = vpack.c.b16 %v1806, %v1805
  %v2201 = vpack.c.b16 %v1808, %v1807
  %v2202 = vpack.c.b16 %v1810, %v1809
  %v2203 = vpack.c.b16 %v1812, %v1811
  %v2204 = vpack.c.b16 %v1814, %v1813
  %v2205 = vpack.c.b16 %v1816, %v1815
  %v2206 = vpack.c.b16 %v1818, %v1817
  %v2207 = vpack.c.b16 %v1820, %v1819
  %v2208 = vpack.c.b16 %v1822, %v1821
  %v2209 = vpack.c.b16 %v1824, %v1823
  %v2210 = vpack.c.b16 %v1826, %v1825
  %v2211 = vpack.c.b16 %v1828, %v1827
  %v2212 = vpack.c.b16 %v1830, %v1829
  %v2213 = vpack.c.b16 %v1832, %v1831
  %v2214 = vpack.c.b16 %v1834, %v1833
  %v2215 = vpack.c.b16 %v1836, %v1835
  %v2216 = vpack.c.b16 %v1838, %v1837
  %v2217 = vpack.c.b16 %v1840, %v1839
  %v2218 = vpack.c.b16 %v1842, %v1841
  %v2219 = vpack.c.b16 %v1844, %v1843
  %v2220 = vpack.c.b16 %v1846, %v1845
  %v2221 = vpack.c.b16 %v1848, %v1847
  %v2222 = vpack.c.b16 %v1850, %v1849
  %v2223 = vpack.c.b16 %v1852, %v1851
  %v2224 = vpack.c.b16 %v1854, %v1853
  %v2225 = vpack.c.b16 %v1856, %v1855
  %v2226 = vpack.c.b16 %v1858, %v1857
  %v2227 = vpack.c.b16 %v1860, %v1859
  %v2228 = vpack.c.b16 %v1862, %v1861
  %v2229 = vpack.c.b16 %v1864, %v1863
  %v2230 = vpack.c.b16 %v1866, %v1865
  %v2231 = vpack.c.b16 %v1868, %v1867
  %v2232 = vpack.c.b16 %v1870, %v1869
  %v2233 = vpack.c.b16 %v1872, %v1871
  %v2234 = vpack.c.b16 %v1874, %v1873
  %v2235 = vpack.c.b16 %v1876, %v1875
  %v2236 = vpack.c.b16 %v1878, %v1877
  %v2237 = vpack.c.b16 %v1880, %v1879
  %v2238 = vpack.c.b16 %v1882, %v1881
  %v2239 = vpack.c.b16 %v1884, %v1883
  %v2240 = vpack.c.b16 %v1886, %v1885
  %v2241 = vpack.c.b16 %v1888, %v1887
  %v2242 = vpack.c.b16 %v1890, %v1889
  %v2243 = vpack.c.b16 %v1892, %v1891
  %v2244 = vpack.c.b16 %v1894, %v1893
  %v2245 = vpack.c.b16 %v1896, %v1895
  %v2246 = vpack.c.b16 %v1898, %v1897
  %v2247 = vpack.c.b16 %v1900, %v1899
  %v2248 = vpack.c.b16 %v1902, %v1901
  %v2249 = vpack.c.b16 %v1904, %v1903
  %v2250 = vpack.c.b16 %v1906, %v1905
  %v2251 = vpack.c.b16 %v1908, %v1907
  %v2252 = vpack.c.b16 %v1910, %v1909
  %v2253 = vpack.c.b16 %v1912, %v1911
  %v2254 = vpack.c.b16 %v1914, %v1913
  %v2255 = vpack.c.b16 %v1916, %v1915
  %v2256 = vpack.c.b16 %v1918, %v1917
  %v2257 = vpack.c.b16 %v1920, %v1919
  %v2258 = vpack.c.b16 %v1922, %v1921
  %v2259 = vpack.c.b16 %v1924, %v1923
  %v2260 = vpack.c.b16 %v1926, %v1925
  %v2261 = vpack.c.b16 %v1928, %v1927
  %v2262 = vpack.c.b16 %v1930, %v1929
  %v2263 = vpack.c.b16 %v1932, %v1931
  %v2264 = vpack.c.b16 %v1934, %v1933
  %v2265 = vpack.c.b16 %v1936, %v1935
  %v2266 = vpack.c.b16 %v1938, %v1937
  %v2267 = vpack.c.b16 %v1940, %v1939
  %v2268 = vpack.c.b16 %v1942, %v1941
  %v2269 = vpack.c.b16 %v1944, %v1943
  %v2270 = vpack.c.b16 %v1946, %v1945
  %v2271 = vpack.c.b16 %v1948, %v1947
  %v2272 = vpack.c.b16 %v1950, %v1949
  %v2273 = vpack.c.b16 %v1952, %v1951
  %v2274 = vpack.c.b16 %v1954, %v1953
  %v2275 = vpack.c.b16 %v1956, %v1955
  %v2276 = vpack.c.b16 %v1958, %v1957
  %v2277 = vpack.c.b16 %v1960, %v1959
  %v2278 = vpack.c.b16 %v1962, %v1961
  %v2279 = vpack.c.b16 %v1964, %v1963
  %v2280 = vpack.c.b16 %v1966, %v1965
  %v2281 = vpack.c.b16 %v1968, %v1967
  %v2282 = vpack.c.b16 %v1969, %v1969
  %vm2595 = vcmask 64512
  %v2597 = vsel %vm2595, %v94, 0
  %vm2599 = vcmask 1043456
  %v2601 = vsel %vm2599, %v2282, 0
  %2603 = vmatpush.bf16.msra.mxu0 %v1977
  %2604 = vmatpush.bf16.msra.mxu0 %v1976
  %2605 = vmatpush.bf16.msra.mxu0 %v1975
  %2606 = vmatpush.bf16.msra.mxu0 %v1974
  %2607 = vmatpush.bf16.msra.mxu0 %v1973
  %2608 = vmatpush.bf16.msra.mxu0 %v1972
  %2609 = vmatpush.bf16.msra.mxu0 %v1971
  %2610 = vmatpush.bf16.msra.mxu0 %v1970
  %2611 = vmatmul.bf16.gmra.mxu0 %v55
  %v2612 = vpop.f32.mrf.mxu0
  %v2613 = vadd.f32 0.0, %v2612
  %v2614 = vpop.f32.mrf.mxu0
  %2615 = vdwg.mxu0
  %2616 = vmatpush.bf16.msra.mxu0 %v1985
  %2617 = vmatpush.bf16.msra.mxu0 %v1984
  %2618 = vmatpush.bf16.msra.mxu0 %v1983
  %2619 = vmatpush.bf16.msra.mxu0 %v1982
  %2620 = vmatpush.bf16.msra.mxu0 %v1981
  %2621 = vmatpush.bf16.msra.mxu0 %v1980
  %2622 = vmatpush.bf16.msra.mxu0 %v1979
  %2623 = vmatpush.bf16.msra.mxu0 %v1978
  %2624 = vmatmul.bf16.gmra.mxu0 %v56
  %v2625 = vpop.f32.mrf.mxu0
  %v2626 = vadd.f32 %v2613, %v2625
  %v2627 = vpop.f32.mrf.mxu0
  %2628 = vdwg.mxu0
  %2629 = vmatpush.bf16.msra.mxu0 %v1993
  %2630 = vmatpush.bf16.msra.mxu0 %v1992
  %2631 = vmatpush.bf16.msra.mxu0 %v1991
  %2632 = vmatpush.bf16.msra.mxu0 %v1990
  %2633 = vmatpush.bf16.msra.mxu0 %v1989
  %2634 = vmatpush.bf16.msra.mxu0 %v1988
  %2635 = vmatpush.bf16.msra.mxu0 %v1987
  %2636 = vmatpush.bf16.msra.mxu0 %v1986
  %2637 = vmatmul.bf16.gmra.mxu0 %v57
  %v2638 = vpop.f32.mrf.mxu0
  %v2639 = vadd.f32 %v2626, %v2638
  %v2640 = vpop.f32.mrf.mxu0
  %2641 = vdwg.mxu0
  %2642 = vmatpush.bf16.msra.mxu0 %v2001
  %2643 = vmatpush.bf16.msra.mxu0 %v2000
  %2644 = vmatpush.bf16.msra.mxu0 %v1999
  %2645 = vmatpush.bf16.msra.mxu0 %v1998
  %2646 = vmatpush.bf16.msra.mxu0 %v1997
  %2647 = vmatpush.bf16.msra.mxu0 %v1996
  %2648 = vmatpush.bf16.msra.mxu0 %v1995
  %2649 = vmatpush.bf16.msra.mxu0 %v1994
  %2650 = vmatmul.bf16.gmra.mxu0 %v58
  %v2651 = vpop.f32.mrf.mxu0
  %v2652 = vadd.f32 %v2639, %v2651
  %v2653 = vpop.f32.mrf.mxu0
  %2654 = vdwg.mxu0
  %2655 = vmatpush.bf16.msra.mxu0 %v2009
  %2656 = vmatpush.bf16.msra.mxu0 %v2008
  %2657 = vmatpush.bf16.msra.mxu0 %v2007
  %2658 = vmatpush.bf16.msra.mxu0 %v2006
  %2659 = vmatpush.bf16.msra.mxu0 %v2005
  %2660 = vmatpush.bf16.msra.mxu0 %v2004
  %2661 = vmatpush.bf16.msra.mxu0 %v2003
  %2662 = vmatpush.bf16.msra.mxu0 %v2002
  %2663 = vmatmul.bf16.gmra.mxu0 %v59
  %v2664 = vpop.f32.mrf.mxu0
  %v2665 = vadd.f32 %v2652, %v2664
  %v2666 = vpop.f32.mrf.mxu0
  %2667 = vdwg.mxu0
  %2668 = vmatpush.bf16.msra.mxu0 %v2017
  %2669 = vmatpush.bf16.msra.mxu0 %v2016
  %2670 = vmatpush.bf16.msra.mxu0 %v2015
  %2671 = vmatpush.bf16.msra.mxu0 %v2014
  %2672 = vmatpush.bf16.msra.mxu0 %v2013
  %2673 = vmatpush.bf16.msra.mxu0 %v2012
  %2674 = vmatpush.bf16.msra.mxu0 %v2011
  %2675 = vmatpush.bf16.msra.mxu0 %v2010
  %2676 = vmatmul.bf16.gmra.mxu0 %v60
  %v2677 = vpop.f32.mrf.mxu0
  %v2678 = vadd.f32 %v2665, %v2677
  %v2679 = vpop.f32.mrf.mxu0
  %2680 = vdwg.mxu0
  %2681 = vmatpush.bf16.msra.mxu0 %v2025
  %2682 = vmatpush.bf16.msra.mxu0 %v2024
  %2683 = vmatpush.bf16.msra.mxu0 %v2023
  %2684 = vmatpush.bf16.msra.mxu0 %v2022
  %2685 = vmatpush.bf16.msra.mxu0 %v2021
  %2686 = vmatpush.bf16.msra.mxu0 %v2020
  %2687 = vmatpush.bf16.msra.mxu0 %v2019
  %2688 = vmatpush.bf16.msra.mxu0 %v2018
  %2689 = vmatmul.bf16.gmra.mxu0 %v61
  %v2690 = vpop.f32.mrf.mxu0
  %v2691 = vadd.f32 %v2678, %v2690
  %v2692 = vpop.f32.mrf.mxu0
  %2693 = vdwg.mxu0
  %2694 = vmatpush.bf16.msra.mxu0 %v2033
  %2695 = vmatpush.bf16.msra.mxu0 %v2032
  %2696 = vmatpush.bf16.msra.mxu0 %v2031
  %2697 = vmatpush.bf16.msra.mxu0 %v2030
  %2698 = vmatpush.bf16.msra.mxu0 %v2029
  %2699 = vmatpush.bf16.msra.mxu0 %v2028
  %2700 = vmatpush.bf16.msra.mxu0 %v2027
  %2701 = vmatpush.bf16.msra.mxu0 %v2026
  %2702 = vmatmul.bf16.gmra.mxu0 %v62
  %v2703 = vpop.f32.mrf.mxu0
  %v2704 = vadd.f32 %v2691, %v2703
  %v2705 = vpop.f32.mrf.mxu0
  %2706 = vdwg.mxu0
  %2707 = vmatpush.bf16.msra.mxu0 %v2041
  %2708 = vmatpush.bf16.msra.mxu0 %v2040
  %2709 = vmatpush.bf16.msra.mxu0 %v2039
  %2710 = vmatpush.bf16.msra.mxu0 %v2038
  %2711 = vmatpush.bf16.msra.mxu0 %v2037
  %2712 = vmatpush.bf16.msra.mxu0 %v2036
  %2713 = vmatpush.bf16.msra.mxu0 %v2035
  %2714 = vmatpush.bf16.msra.mxu0 %v2034
  %2715 = vmatmul.bf16.gmra.mxu0 %v63
  %v2716 = vpop.f32.mrf.mxu0
  %v2717 = vadd.f32 %v2704, %v2716
  %v2718 = vpop.f32.mrf.mxu0
  %2719 = vdwg.mxu0
  %2720 = vmatpush.bf16.msra.mxu0 %v2049
  %2721 = vmatpush.bf16.msra.mxu0 %v2048
  %2722 = vmatpush.bf16.msra.mxu0 %v2047
  %2723 = vmatpush.bf16.msra.mxu0 %v2046
  %2724 = vmatpush.bf16.msra.mxu0 %v2045
  %2725 = vmatpush.bf16.msra.mxu0 %v2044
  %2726 = vmatpush.bf16.msra.mxu0 %v2043
  %2727 = vmatpush.bf16.msra.mxu0 %v2042
  %2728 = vmatmul.bf16.gmra.mxu0 %v64
  %v2729 = vpop.f32.mrf.mxu0
  %v2730 = vadd.f32 %v2717, %v2729
  %v2731 = vpop.f32.mrf.mxu0
  %2732 = vdwg.mxu0
  %2733 = vmatpush.bf16.msra.mxu0 %v2057
  %2734 = vmatpush.bf16.msra.mxu0 %v2056
  %2735 = vmatpush.bf16.msra.mxu0 %v2055
  %2736 = vmatpush.bf16.msra.mxu0 %v2054
  %2737 = vmatpush.bf16.msra.mxu0 %v2053
  %2738 = vmatpush.bf16.msra.mxu0 %v2052
  %2739 = vmatpush.bf16.msra.mxu0 %v2051
  %2740 = vmatpush.bf16.msra.mxu0 %v2050
  %2741 = vmatmul.bf16.gmra.mxu0 %v65
  %v2742 = vpop.f32.mrf.mxu0
  %v2743 = vadd.f32 %v2730, %v2742
  %v2744 = vpop.f32.mrf.mxu0
  %2745 = vdwg.mxu0
  %2746 = vmatpush.bf16.msra.mxu0 %v2065
  %2747 = vmatpush.bf16.msra.mxu0 %v2064
  %2748 = vmatpush.bf16.msra.mxu0 %v2063
  %2749 = vmatpush.bf16.msra.mxu0 %v2062
  %2750 = vmatpush.bf16.msra.mxu0 %v2061
  %2751 = vmatpush.bf16.msra.mxu0 %v2060
  %2752 = vmatpush.bf16.msra.mxu0 %v2059
  %2753 = vmatpush.bf16.msra.mxu0 %v2058
  %2754 = vmatmul.bf16.gmra.mxu0 %v66
  %v2755 = vpop.f32.mrf.mxu0
  %v2756 = vadd.f32 %v2743, %v2755
  %v2757 = vpop.f32.mrf.mxu0
  %2758 = vdwg.mxu0
  %2759 = vmatpush.bf16.msra.mxu0 %v2073
  %2760 = vmatpush.bf16.msra.mxu0 %v2072
  %2761 = vmatpush.bf16.msra.mxu0 %v2071
  %2762 = vmatpush.bf16.msra.mxu0 %v2070
  %2763 = vmatpush.bf16.msra.mxu0 %v2069
  %2764 = vmatpush.bf16.msra.mxu0 %v2068
  %2765 = vmatpush.bf16.msra.mxu0 %v2067
  %2766 = vmatpush.bf16.msra.mxu0 %v2066
  %2767 = vmatmul.bf16.gmra.mxu0 %v67
  %v2768 = vpop.f32.mrf.mxu0
  %v2769 = vadd.f32 %v2756, %v2768
  %v2770 = vpop.f32.mrf.mxu0
  %2771 = vdwg.mxu0
  %2772 = vmatpush.bf16.msra.mxu0 %v2081
  %2773 = vmatpush.bf16.msra.mxu0 %v2080
  %2774 = vmatpush.bf16.msra.mxu0 %v2079
  %2775 = vmatpush.bf16.msra.mxu0 %v2078
  %2776 = vmatpush.bf16.msra.mxu0 %v2077
  %2777 = vmatpush.bf16.msra.mxu0 %v2076
  %2778 = vmatpush.bf16.msra.mxu0 %v2075
  %2779 = vmatpush.bf16.msra.mxu0 %v2074
  %2780 = vmatmul.bf16.gmra.mxu0 %v68
  %v2781 = vpop.f32.mrf.mxu0
  %v2782 = vadd.f32 %v2769, %v2781
  %v2783 = vpop.f32.mrf.mxu0
  %2784 = vdwg.mxu0
  %2785 = vmatpush.bf16.msra.mxu0 %v2089
  %2786 = vmatpush.bf16.msra.mxu0 %v2088
  %2787 = vmatpush.bf16.msra.mxu0 %v2087
  %2788 = vmatpush.bf16.msra.mxu0 %v2086
  %2789 = vmatpush.bf16.msra.mxu0 %v2085
  %2790 = vmatpush.bf16.msra.mxu0 %v2084
  %2791 = vmatpush.bf16.msra.mxu0 %v2083
  %2792 = vmatpush.bf16.msra.mxu0 %v2082
  %2793 = vmatmul.bf16.gmra.mxu0 %v69
  %v2794 = vpop.f32.mrf.mxu0
  %v2795 = vadd.f32 %v2782, %v2794
  %v2796 = vpop.f32.mrf.mxu0
  %2797 = vdwg.mxu0
  %2798 = vmatpush.bf16.msra.mxu0 %v2097
  %2799 = vmatpush.bf16.msra.mxu0 %v2096
  %2800 = vmatpush.bf16.msra.mxu0 %v2095
  %2801 = vmatpush.bf16.msra.mxu0 %v2094
  %2802 = vmatpush.bf16.msra.mxu0 %v2093
  %2803 = vmatpush.bf16.msra.mxu0 %v2092
  %2804 = vmatpush.bf16.msra.mxu0 %v2091
  %2805 = vmatpush.bf16.msra.mxu0 %v2090
  %2806 = vmatmul.bf16.gmra.mxu0 %v70
  %v2807 = vpop.f32.mrf.mxu0
  %v2808 = vadd.f32 %v2795, %v2807
  %v2809 = vpop.f32.mrf.mxu0
  %2810 = vdwg.mxu0
  %2811 = vmatpush.bf16.msra.mxu0 %v2105
  %2812 = vmatpush.bf16.msra.mxu0 %v2104
  %2813 = vmatpush.bf16.msra.mxu0 %v2103
  %2814 = vmatpush.bf16.msra.mxu0 %v2102
  %2815 = vmatpush.bf16.msra.mxu0 %v2101
  %2816 = vmatpush.bf16.msra.mxu0 %v2100
  %2817 = vmatpush.bf16.msra.mxu0 %v2099
  %2818 = vmatpush.bf16.msra.mxu0 %v2098
  %2819 = vmatmul.bf16.gmra.mxu0 %v71
  %v2820 = vpop.f32.mrf.mxu0
  %v2821 = vadd.f32 %v2808, %v2820
  %v2822 = vpop.f32.mrf.mxu0
  %2823 = vdwg.mxu0
  %2824 = vmatpush.bf16.msra.mxu0 %v2113
  %2825 = vmatpush.bf16.msra.mxu0 %v2112
  %2826 = vmatpush.bf16.msra.mxu0 %v2111
  %2827 = vmatpush.bf16.msra.mxu0 %v2110
  %2828 = vmatpush.bf16.msra.mxu0 %v2109
  %2829 = vmatpush.bf16.msra.mxu0 %v2108
  %2830 = vmatpush.bf16.msra.mxu0 %v2107
  %2831 = vmatpush.bf16.msra.mxu0 %v2106
  %2832 = vmatmul.bf16.gmra.mxu0 %v72
  %v2833 = vpop.f32.mrf.mxu0
  %v2834 = vadd.f32 %v2821, %v2833
  %v2835 = vpop.f32.mrf.mxu0
  %2836 = vdwg.mxu0
  %2837 = vmatpush.bf16.msra.mxu0 %v2121
  %2838 = vmatpush.bf16.msra.mxu0 %v2120
  %2839 = vmatpush.bf16.msra.mxu0 %v2119
  %2840 = vmatpush.bf16.msra.mxu0 %v2118
  %2841 = vmatpush.bf16.msra.mxu0 %v2117
  %2842 = vmatpush.bf16.msra.mxu0 %v2116
  %2843 = vmatpush.bf16.msra.mxu0 %v2115
  %2844 = vmatpush.bf16.msra.mxu0 %v2114
  %2845 = vmatmul.bf16.gmra.mxu0 %v73
  %v2846 = vpop.f32.mrf.mxu0
  %v2847 = vadd.f32 %v2834, %v2846
  %v2848 = vpop.f32.mrf.mxu0
  %2849 = vdwg.mxu0
  %2850 = vmatpush.bf16.msra.mxu0 %v2129
  %2851 = vmatpush.bf16.msra.mxu0 %v2128
  %2852 = vmatpush.bf16.msra.mxu0 %v2127
  %2853 = vmatpush.bf16.msra.mxu0 %v2126
  %2854 = vmatpush.bf16.msra.mxu0 %v2125
  %2855 = vmatpush.bf16.msra.mxu0 %v2124
  %2856 = vmatpush.bf16.msra.mxu0 %v2123
  %2857 = vmatpush.bf16.msra.mxu0 %v2122
  %2858 = vmatmul.bf16.gmra.mxu0 %v74
  %v2859 = vpop.f32.mrf.mxu0
  %v2860 = vadd.f32 %v2847, %v2859
  %v2861 = vpop.f32.mrf.mxu0
  %2862 = vdwg.mxu0
  %2863 = vmatpush.bf16.msra.mxu0 %v2137
  %2864 = vmatpush.bf16.msra.mxu0 %v2136
  %2865 = vmatpush.bf16.msra.mxu0 %v2135
  %2866 = vmatpush.bf16.msra.mxu0 %v2134
  %2867 = vmatpush.bf16.msra.mxu0 %v2133
  %2868 = vmatpush.bf16.msra.mxu0 %v2132
  %2869 = vmatpush.bf16.msra.mxu0 %v2131
  %2870 = vmatpush.bf16.msra.mxu0 %v2130
  %2871 = vmatmul.bf16.gmra.mxu0 %v75
  %v2872 = vpop.f32.mrf.mxu0
  %v2873 = vadd.f32 %v2860, %v2872
  %v2874 = vpop.f32.mrf.mxu0
  %2875 = vdwg.mxu0
  %2876 = vmatpush.bf16.msra.mxu0 %v2145
  %2877 = vmatpush.bf16.msra.mxu0 %v2144
  %2878 = vmatpush.bf16.msra.mxu0 %v2143
  %2879 = vmatpush.bf16.msra.mxu0 %v2142
  %2880 = vmatpush.bf16.msra.mxu0 %v2141
  %2881 = vmatpush.bf16.msra.mxu0 %v2140
  %2882 = vmatpush.bf16.msra.mxu0 %v2139
  %2883 = vmatpush.bf16.msra.mxu0 %v2138
  %2884 = vmatmul.bf16.gmra.mxu0 %v76
  %v2885 = vpop.f32.mrf.mxu0
  %v2886 = vadd.f32 %v2873, %v2885
  %v2887 = vpop.f32.mrf.mxu0
  %2888 = vdwg.mxu0
  %2889 = vmatpush.bf16.msra.mxu0 %v2153
  %2890 = vmatpush.bf16.msra.mxu0 %v2152
  %2891 = vmatpush.bf16.msra.mxu0 %v2151
  %2892 = vmatpush.bf16.msra.mxu0 %v2150
  %2893 = vmatpush.bf16.msra.mxu0 %v2149
  %2894 = vmatpush.bf16.msra.mxu0 %v2148
  %2895 = vmatpush.bf16.msra.mxu0 %v2147
  %2896 = vmatpush.bf16.msra.mxu0 %v2146
  %2897 = vmatmul.bf16.gmra.mxu0 %v77
  %v2898 = vpop.f32.mrf.mxu0
  %v2899 = vadd.f32 %v2886, %v2898
  %v2900 = vpop.f32.mrf.mxu0
  %2901 = vdwg.mxu0
  %2902 = vmatpush.bf16.msra.mxu0 %v2161
  %2903 = vmatpush.bf16.msra.mxu0 %v2160
  %2904 = vmatpush.bf16.msra.mxu0 %v2159
  %2905 = vmatpush.bf16.msra.mxu0 %v2158
  %2906 = vmatpush.bf16.msra.mxu0 %v2157
  %2907 = vmatpush.bf16.msra.mxu0 %v2156
  %2908 = vmatpush.bf16.msra.mxu0 %v2155
  %2909 = vmatpush.bf16.msra.mxu0 %v2154
  %2910 = vmatmul.bf16.gmra.mxu0 %v78
  %v2911 = vpop.f32.mrf.mxu0
  %v2912 = vadd.f32 %v2899, %v2911
  %v2913 = vpop.f32.mrf.mxu0
  %2914 = vdwg.mxu0
  %2915 = vmatpush.bf16.msra.mxu0 %v2169
  %2916 = vmatpush.bf16.msra.mxu0 %v2168
  %2917 = vmatpush.bf16.msra.mxu0 %v2167
  %2918 = vmatpush.bf16.msra.mxu0 %v2166
  %2919 = vmatpush.bf16.msra.mxu0 %v2165
  %2920 = vmatpush.bf16.msra.mxu0 %v2164
  %2921 = vmatpush.bf16.msra.mxu0 %v2163
  %2922 = vmatpush.bf16.msra.mxu0 %v2162
  %2923 = vmatmul.bf16.gmra.mxu0 %v79
  %v2924 = vpop.f32.mrf.mxu0
  %v2925 = vadd.f32 %v2912, %v2924
  %v2926 = vpop.f32.mrf.mxu0
  %2927 = vdwg.mxu0
  %2928 = vmatpush.bf16.msra.mxu0 %v2177
  %2929 = vmatpush.bf16.msra.mxu0 %v2176
  %2930 = vmatpush.bf16.msra.mxu0 %v2175
  %2931 = vmatpush.bf16.msra.mxu0 %v2174
  %2932 = vmatpush.bf16.msra.mxu0 %v2173
  %2933 = vmatpush.bf16.msra.mxu0 %v2172
  %2934 = vmatpush.bf16.msra.mxu0 %v2171
  %2935 = vmatpush.bf16.msra.mxu0 %v2170
  %2936 = vmatmul.bf16.gmra.mxu0 %v80
  %v2937 = vpop.f32.mrf.mxu0
  %v2938 = vadd.f32 %v2925, %v2937
  %v2939 = vpop.f32.mrf.mxu0
  %2940 = vdwg.mxu0
  %2941 = vmatpush.bf16.msra.mxu0 %v2185
  %2942 = vmatpush.bf16.msra.mxu0 %v2184
  %2943 = vmatpush.bf16.msra.mxu0 %v2183
  %2944 = vmatpush.bf16.msra.mxu0 %v2182
  %2945 = vmatpush.bf16.msra.mxu0 %v2181
  %2946 = vmatpush.bf16.msra.mxu0 %v2180
  %2947 = vmatpush.bf16.msra.mxu0 %v2179
  %2948 = vmatpush.bf16.msra.mxu0 %v2178
  %2949 = vmatmul.bf16.gmra.mxu0 %v81
  %v2950 = vpop.f32.mrf.mxu0
  %v2951 = vadd.f32 %v2938, %v2950
  %v2952 = vpop.f32.mrf.mxu0
  %2953 = vdwg.mxu0
  %2954 = vmatpush.bf16.msra.mxu0 %v2193
  %2955 = vmatpush.bf16.msra.mxu0 %v2192
  %2956 = vmatpush.bf16.msra.mxu0 %v2191
  %2957 = vmatpush.bf16.msra.mxu0 %v2190
  %2958 = vmatpush.bf16.msra.mxu0 %v2189
  %2959 = vmatpush.bf16.msra.mxu0 %v2188
  %2960 = vmatpush.bf16.msra.mxu0 %v2187
  %2961 = vmatpush.bf16.msra.mxu0 %v2186
  %2962 = vmatmul.bf16.gmra.mxu0 %v82
  %v2963 = vpop.f32.mrf.mxu0
  %v2964 = vadd.f32 %v2951, %v2963
  %v2965 = vpop.f32.mrf.mxu0
  %2966 = vdwg.mxu0
  %2967 = vmatpush.bf16.msra.mxu0 %v2201
  %2968 = vmatpush.bf16.msra.mxu0 %v2200
  %2969 = vmatpush.bf16.msra.mxu0 %v2199
  %2970 = vmatpush.bf16.msra.mxu0 %v2198
  %2971 = vmatpush.bf16.msra.mxu0 %v2197
  %2972 = vmatpush.bf16.msra.mxu0 %v2196
  %2973 = vmatpush.bf16.msra.mxu0 %v2195
  %2974 = vmatpush.bf16.msra.mxu0 %v2194
  %2975 = vmatmul.bf16.gmra.mxu0 %v83
  %v2976 = vpop.f32.mrf.mxu0
  %v2977 = vadd.f32 %v2964, %v2976
  %v2978 = vpop.f32.mrf.mxu0
  %2979 = vdwg.mxu0
  %2980 = vmatpush.bf16.msra.mxu0 %v2209
  %2981 = vmatpush.bf16.msra.mxu0 %v2208
  %2982 = vmatpush.bf16.msra.mxu0 %v2207
  %2983 = vmatpush.bf16.msra.mxu0 %v2206
  %2984 = vmatpush.bf16.msra.mxu0 %v2205
  %2985 = vmatpush.bf16.msra.mxu0 %v2204
  %2986 = vmatpush.bf16.msra.mxu0 %v2203
  %2987 = vmatpush.bf16.msra.mxu0 %v2202
  %2988 = vmatmul.bf16.gmra.mxu0 %v84
  %v2989 = vpop.f32.mrf.mxu0
  %v2990 = vadd.f32 %v2977, %v2989
  %v2991 = vpop.f32.mrf.mxu0
  %2992 = vdwg.mxu0
  %2993 = vmatpush.bf16.msra.mxu0 %v2217
  %2994 = vmatpush.bf16.msra.mxu0 %v2216
  %2995 = vmatpush.bf16.msra.mxu0 %v2215
  %2996 = vmatpush.bf16.msra.mxu0 %v2214
  %2997 = vmatpush.bf16.msra.mxu0 %v2213
  %2998 = vmatpush.bf16.msra.mxu0 %v2212
  %2999 = vmatpush.bf16.msra.mxu0 %v2211
  %3000 = vmatpush.bf16.msra.mxu0 %v2210
  %3001 = vmatmul.bf16.gmra.mxu0 %v85
  %v3002 = vpop.f32.mrf.mxu0
  %v3003 = vadd.f32 %v2990, %v3002
  %v3004 = vpop.f32.mrf.mxu0
  %3005 = vdwg.mxu0
  %3006 = vmatpush.bf16.msra.mxu0 %v2225
  %3007 = vmatpush.bf16.msra.mxu0 %v2224
  %3008 = vmatpush.bf16.msra.mxu0 %v2223
  %3009 = vmatpush.bf16.msra.mxu0 %v2222
  %3010 = vmatpush.bf16.msra.mxu0 %v2221
  %3011 = vmatpush.bf16.msra.mxu0 %v2220
  %3012 = vmatpush.bf16.msra.mxu0 %v2219
  %3013 = vmatpush.bf16.msra.mxu0 %v2218
  %3014 = vmatmul.bf16.gmra.mxu0 %v86
  %v3015 = vpop.f32.mrf.mxu0
  %v3016 = vadd.f32 %v3003, %v3015
  %v3017 = vpop.f32.mrf.mxu0
  %3018 = vdwg.mxu0
  %3019 = vmatpush.bf16.msra.mxu0 %v2233
  %3020 = vmatpush.bf16.msra.mxu0 %v2232
  %3021 = vmatpush.bf16.msra.mxu0 %v2231
  %3022 = vmatpush.bf16.msra.mxu0 %v2230
  %3023 = vmatpush.bf16.msra.mxu0 %v2229
  %3024 = vmatpush.bf16.msra.mxu0 %v2228
  %3025 = vmatpush.bf16.msra.mxu0 %v2227
  %3026 = vmatpush.bf16.msra.mxu0 %v2226
  %3027 = vmatmul.bf16.gmra.mxu0 %v87
  %v3028 = vpop.f32.mrf.mxu0
  %v3029 = vadd.f32 %v3016, %v3028
  %v3030 = vpop.f32.mrf.mxu0
  %3031 = vdwg.mxu0
  %3032 = vmatpush.bf16.msra.mxu0 %v2241
  %3033 = vmatpush.bf16.msra.mxu0 %v2240
  %3034 = vmatpush.bf16.msra.mxu0 %v2239
  %3035 = vmatpush.bf16.msra.mxu0 %v2238
  %3036 = vmatpush.bf16.msra.mxu0 %v2237
  %3037 = vmatpush.bf16.msra.mxu0 %v2236
  %3038 = vmatpush.bf16.msra.mxu0 %v2235
  %3039 = vmatpush.bf16.msra.mxu0 %v2234
  %3040 = vmatmul.bf16.gmra.mxu0 %v88
  %v3041 = vpop.f32.mrf.mxu0
  %v3042 = vadd.f32 %v3029, %v3041
  %v3043 = vpop.f32.mrf.mxu0
  %3044 = vdwg.mxu0
  %3045 = vmatpush.bf16.msra.mxu0 %v2249
  %3046 = vmatpush.bf16.msra.mxu0 %v2248
  %3047 = vmatpush.bf16.msra.mxu0 %v2247
  %3048 = vmatpush.bf16.msra.mxu0 %v2246
  %3049 = vmatpush.bf16.msra.mxu0 %v2245
  %3050 = vmatpush.bf16.msra.mxu0 %v2244
  %3051 = vmatpush.bf16.msra.mxu0 %v2243
  %3052 = vmatpush.bf16.msra.mxu0 %v2242
  %3053 = vmatmul.bf16.gmra.mxu0 %v89
  %v3054 = vpop.f32.mrf.mxu0
  %v3055 = vadd.f32 %v3042, %v3054
  %v3056 = vpop.f32.mrf.mxu0
  %3057 = vdwg.mxu0
  %3058 = vmatpush.bf16.msra.mxu0 %v2257
  %3059 = vmatpush.bf16.msra.mxu0 %v2256
  %3060 = vmatpush.bf16.msra.mxu0 %v2255
  %3061 = vmatpush.bf16.msra.mxu0 %v2254
  %3062 = vmatpush.bf16.msra.mxu0 %v2253
  %3063 = vmatpush.bf16.msra.mxu0 %v2252
  %3064 = vmatpush.bf16.msra.mxu0 %v2251
  %3065 = vmatpush.bf16.msra.mxu0 %v2250
  %3066 = vmatmul.bf16.gmra.mxu0 %v90
  %v3067 = vpop.f32.mrf.mxu0
  %v3068 = vadd.f32 %v3055, %v3067
  %v3069 = vpop.f32.mrf.mxu0
  %3070 = vdwg.mxu0
  %3071 = vmatpush.bf16.msra.mxu0 %v2265
  %3072 = vmatpush.bf16.msra.mxu0 %v2264
  %3073 = vmatpush.bf16.msra.mxu0 %v2263
  %3074 = vmatpush.bf16.msra.mxu0 %v2262
  %3075 = vmatpush.bf16.msra.mxu0 %v2261
  %3076 = vmatpush.bf16.msra.mxu0 %v2260
  %3077 = vmatpush.bf16.msra.mxu0 %v2259
  %3078 = vmatpush.bf16.msra.mxu0 %v2258
  %3079 = vmatmul.bf16.gmra.mxu0 %v91
  %v3080 = vpop.f32.mrf.mxu0
  %v3081 = vadd.f32 %v3068, %v3080
  %v3082 = vpop.f32.mrf.mxu0
  %3083 = vdwg.mxu0
  %3084 = vmatpush.bf16.msra.mxu0 %v2273
  %3085 = vmatpush.bf16.msra.mxu0 %v2272
  %3086 = vmatpush.bf16.msra.mxu0 %v2271
  %3087 = vmatpush.bf16.msra.mxu0 %v2270
  %3088 = vmatpush.bf16.msra.mxu0 %v2269
  %3089 = vmatpush.bf16.msra.mxu0 %v2268
  %3090 = vmatpush.bf16.msra.mxu0 %v2267
  %3091 = vmatpush.bf16.msra.mxu0 %v2266
  %3092 = vmatmul.bf16.gmra.mxu0 %v92
  %v3093 = vpop.f32.mrf.mxu0
  %v3094 = vadd.f32 %v3081, %v3093
  %v3095 = vpop.f32.mrf.mxu0
  %3096 = vdwg.mxu0
  %3097 = vmatpush.bf16.msra.mxu0 %v2281
  %3098 = vmatpush.bf16.msra.mxu0 %v2280
  %3099 = vmatpush.bf16.msra.mxu0 %v2279
  %3100 = vmatpush.bf16.msra.mxu0 %v2278
  %3101 = vmatpush.bf16.msra.mxu0 %v2277
  %3102 = vmatpush.bf16.msra.mxu0 %v2276
  %3103 = vmatpush.bf16.msra.mxu0 %v2275
  %3104 = vmatpush.bf16.msra.mxu0 %v2274
  %3105 = vmatmul.bf16.gmra.mxu0 %v93
  %v3106 = vpop.f32.mrf.mxu0
  %v3107 = vadd.f32 %v3094, %v3106
  %v3108 = vpop.f32.mrf.mxu0
  %3109 = vdwg.mxu0
  %3110 = vmatpush.bf16.msra.mxu0 0
  %3111 = vmatpush.bf16.msra.mxu0 0
  %3112 = vmatpush.bf16.msra.mxu0 0
  %3113 = vmatpush.bf16.msra.mxu0 0
  %3114 = vmatpush.bf16.msra.mxu0 0
  %3115 = vmatpush.bf16.msra.mxu0 0
  %3116 = vmatpush.bf16.msra.mxu0 0
  %3117 = vmatpush.bf16.msra.mxu0 %v2601
  %3118 = vmatmul.bf16.gmra.mxu0 %v2597
  %v3119 = vpop.f32.mrf.mxu0
  %v3120 = vadd.f32 %v3107, %v3119
  %v3121 = vpop.f32.mrf.mxu0
  %3122 = vdwg.mxu0
  %3124 = vrot.lane.b32.xlu0 %v3120, 126
  %v3125 = vpop.permute.xlu0 %3124
  %v3127 = vadd.f32 %v3120, %v3125
  %v3128 = vld [vmem:[%s2] sm:$0x1]
  %v3130 = vperm.slane %v3128, 0
  %v3132 = vadd.f32 %v3127, %v3130
  %vm3133 = vcmask 15360
  %3134 = vst.msk [vmem:[%s3] sm:$0xff] %vm3133, %v3132
  // Predicated region
  $region14: #{tpu_custom_call.1} parent=0 // pred_check
    _
  $region15: #{tpu_custom_call.1} parent=0 // pred_check_branch
    %3136 = sbr.rel (0) target = $region17
  $region16: #{tpu_custom_call.1} parent=0 // pred_region
    _
  $region17: #{tpu_custom_call.1} parent=0 // pred_fallthru
    _
  // Predicated region
  $region18: #{tpu_custom_call.1} parent=0 // pred_check
    _
  $region19: #{tpu_custom_call.1} parent=0 // pred_check_branch
    %3138 = sbr.rel (0) target = $region21
  $region20: #{tpu_custom_call.1} parent=0 // pred_region
    _
  $region21: #{tpu_custom_call.1} parent=0 // pred_fallthru
    _

</llo_original>
